<compile_context>
chip_gen: v7x
topology: tpu7x:2x2x1
jax: 0.10.0
libtpu: 0.0.40
codegen_flags: <defaults>
</compile_context>

<pallas_src>
import jax
import jax.numpy as jnp
from jax.experimental import pallas as pl
from jax.experimental.pallas import tpu as pltpu


def _round_up(x, m):
    return ((x + m - 1) // m) * m


_VMEM_BUDGET = 44 * 1024 * 1024       # per-step working-set target (fits v7x)
_VMEM_LIMIT = 64 * 1024 * 1024        # scoped-VMEM override (valid on all gens)


def _estimate_step_vmem(bn, bq, sp, dp, cb, ob, ab, has_mask):
    """Rough per-grid-step VMEM bytes (double-buffered blocks + f32 temps)."""
    b = 0
    b += 2 * bn * bq * dp * cb                    # q input
    b += 2 * 2 * bn * sp * dp * cb                # k + v inputs
    if has_mask:
        b += 2 * bn * bq * sp                     # int8 mask
    b += 3 * 2 * dp * dp * cb                     # Wq/Wk/Wv (conservative x2)
    b += 2 * bn * bq * dp * ob                    # out
    b += 2 * bn * bq * sp * ab                    # attn
    b += 2 * bn * sp * dp * cb                    # kp/vp scratch (cached K/V)
    # live f32 intermediates: scores/e/attn + qp + K/V projection epilogue
    b += 3 * bn * bq * sp * 4 + bn * bq * dp * 4 + 2 * bn * sp * dp * 4
    return b


def _select_blocks(N, q_rows, sp, dp, cb, ob, ab, has_mask, sub):
    # Keep >=2 batch blocks when possible so v7x's two TensorCores both get
    # work on the "parallel" axis; v5e/v6e (single TC) are unaffected.
    block_n = max(1, min(8, -(-N // 2), N))
    block_q = max(sub, min(q_rows, 256))
    while (_estimate_step_vmem(block_n, block_q, sp, dp, cb, ob, ab, has_mask)
           > _VMEM_BUDGET):
        if block_q > sub:
            block_q = max(sub, _round_up(block_q // 2, sub))
        elif block_n > 1:
            block_n = max(1, block_n // 2)
        else:
            break
    return block_n, block_q


def _make_kernel(has_mask, s_valid, s_padded, matmul_dtype):
    mask_pad_cols = (not has_mask) and (s_padded > s_valid)

    def kernel(*refs):
        if has_mask:
            (q_ref, k_ref, v_ref, mask_ref, wq_ref, wk_ref, wv_ref,
             out_ref, attn_ref, kp_ref, vp_ref) = refs
        else:
            (q_ref, k_ref, v_ref, wq_ref, wk_ref, wv_ref,
             out_ref, attn_ref, kp_ref, vp_ref) = refs
            mask_ref = None

        nb, tq, dp = q_ref.shape
        sp = k_ref.shape[1]

        # K/V projections: one big batch-folded MXU matmul per *batch block*,
        # cached in VMEM scratch (compute dtype) and reused across query tiles.
        @pl.when(pl.program_id(1) == 0)
        def _project_kv():
            k2 = k_ref[...].reshape(nb * sp, dp)
            v2 = v_ref[...].reshape(nb * sp, dp)
            kp = jnp.dot(k2, wk_ref[...], preferred_element_type=jnp.float32)
            vp = jnp.dot(v2, wv_ref[...], preferred_element_type=jnp.float32)
            kp_ref[...] = kp.reshape(nb, sp, dp).astype(kp_ref.dtype)
            vp_ref[...] = vp.reshape(nb, sp, dp).astype(vp_ref.dtype)

        # Query projection (scale already folded into Wq on the host).
        q2 = q_ref[...].reshape(nb * tq, dp)
        qp = jnp.dot(q2, wq_ref[...], preferred_element_type=jnp.float32)
        qp = qp.reshape(nb, tq, dp).astype(matmul_dtype)

        # Batched Q @ K^T: contract on D directly (no materialized transpose).
        scores = jnp.einsum("bqd,bkd->bqk", qp, kp_ref[...],
                            preferred_element_type=jnp.float32)

        neg = jnp.float32(-1e30)   # large-finite: fully-masked rows -> uniform
        if has_mask:
            # int8 mask (1 == masked); padded key columns arrive pre-masked.
            scores = jnp.where(mask_ref[...] != 0, neg, scores)
        elif mask_pad_cols:
            # Mask only the zero-padded key columns, generated in-kernel.
            col = jax.lax.broadcasted_iota(jnp.int32, scores.shape, 2)
            scores = jnp.where(col >= s_valid, neg, scores)

        # Softmax over the (padded) key axis, in f32.
        row_max = jnp.max(scores, axis=-1, keepdims=True)
        e = jnp.exp(scores - row_max)
        denom = jnp.sum(e, axis=-1, keepdims=True)
        attn = e * pl.reciprocal(denom, approx=False)

        # attn @ V (dropout p=0.0 -> identity).
        out = jnp.einsum("bqs,bsd->bqd", attn.astype(matmul_dtype), vp_ref[...],
                         preferred_element_type=jnp.float32)

        out_ref[...] = out.astype(out_ref.dtype)
        attn_ref[...] = attn.astype(attn_ref.dtype)

    return kernel


def cross_attention(queries, keys, values, wq, wk, wv, attn_mask=None, *,
                    block_n=None, block_q=None, compute_dtype=None,
                    attn_dtype=None):
    """Single-head cross attention matching the PyTorch module's forward.

    queries: (N, Q, D); keys/values: (N, S, D); wq/wk/wv: (D, D) nn.Linear
    weights (out_features, in_features), no bias; attn_mask: optional (N, Q, S)
    boolean (True == masked).  Returns (output (N, Q, D), attn (N, Q, S)).

    compute_dtype controls MXU operand precision (accumulation is always f32).
    Default for f32 inputs is bf16 (MXU-native on v5e/v6e/v7x); pass
    jnp.float32 to match the reference to tight tolerance.
    attn_dtype defaults to the input dtype; pass jnp.bfloat16 to halve the
    attn HBM writeback when exact probabilities are not needed downstream.
    """
    N, Q, D = queries.shape
    S = keys.shape[1]
    scale = 1.0 / (D ** 0.5)

    if compute_dtype is None:
        compute_dtype = (jnp.bfloat16 if queries.dtype == jnp.float32
                         else queries.dtype)
    compute_dtype = jnp.dtype(compute_dtype)
    out_dtype = jnp.dtype(queries.dtype)
    attn_dtype = jnp.dtype(out_dtype if attn_dtype is None else attn_dtype)

    # Lane-dense padding; sublane pack is 16 rows for bf16, 8 for f32.
    sub = 16 if compute_dtype.itemsize < 4 else 8
    dp = _round_up(D, 128)
    sp = _round_up(S, 128)
    q_rows = _round_up(Q, sub)

    has_mask = attn_mask is not None
    auto_n, auto_q = _select_blocks(N, q_rows, sp, dp, compute_dtype.itemsize,
                                    out_dtype.itemsize, attn_dtype.itemsize,
                                    has_mask, sub)
    if block_n is None:
        block_n = auto_n
    if block_q is None:
        block_q = auto_q
    block_n = max(1, min(int(block_n), N))
    block_q = max(sub, _round_up(min(int(block_q), q_rows), sub))
    q_rows = _round_up(q_rows, block_q)
    n_rows = _round_up(N, block_n)

    # Zero-pad inputs (padded rows/cols contribute nothing after masking).
    q_p = jnp.pad(queries, ((0, n_rows - N), (0, q_rows - Q), (0, dp - D)))
    k_p = jnp.pad(keys, ((0, n_rows - N), (0, sp - S), (0, dp - D)))
    v_p = jnp.pad(values, ((0, n_rows - N), (0, sp - S), (0, dp - D)))
    q_p = q_p.astype(compute_dtype)
    k_p = k_p.astype(compute_dtype)
    v_p = v_p.astype(compute_dtype)

    # nn.Linear computes x @ W.T; pre-transpose, fold the softmax scale into
    # Wq (removes a per-step (bq x sp) VPU multiply), pad, cast once.
    wq_t = jnp.pad(wq.T * jnp.float32(scale),
                   ((0, dp - D), (0, dp - D))).astype(compute_dtype)
    wk_t = jnp.pad(wk.T, ((0, dp - D), (0, dp - D))).astype(compute_dtype)
    wv_t = jnp.pad(wv.T, ((0, dp - D), (0, dp - D))).astype(compute_dtype)

    inputs = [q_p, k_p, v_p]
    in_specs = [
        pl.BlockSpec((block_n, block_q, dp), lambda b, qi: (b, qi, 0)),  # q
        pl.BlockSpec((block_n, sp, dp), lambda b, qi: (b, 0, 0)),        # k
        pl.BlockSpec((block_n, sp, dp), lambda b, qi: (b, 0, 0)),        # v
    ]
    if has_mask:
        # int8 mask (1 byte/elem): padded key columns pre-masked (value 1).
        mask_i8 = attn_mask.astype(jnp.int8)
        mask_i8 = jnp.pad(mask_i8, ((0, n_rows - N), (0, q_rows - Q), (0, 0)))
        mask_i8 = jnp.pad(mask_i8, ((0, 0), (0, 0), (0, sp - S)),
                          constant_values=jnp.int8(1))
        inputs.append(mask_i8)
        in_specs.append(
            pl.BlockSpec((block_n, block_q, sp), lambda b, qi: (b, qi, 0)))
    inputs += [wq_t, wk_t, wv_t]
    in_specs += [pl.BlockSpec((dp, dp), lambda b, qi: (0, 0))] * 3

    kernel = _make_kernel(has_mask, S, sp, compute_dtype)

    grid = (n_rows // block_n, q_rows // block_q)

    out_p, attn_p = pl.pallas_call(
        kernel,
        out_shape=(
            jax.ShapeDtypeStruct((n_rows, q_rows, dp), out_dtype),
            jax.ShapeDtypeStruct((n_rows, q_rows, sp), attn_dtype),
        ),
        grid_spec=pltpu.PrefetchScalarGridSpec(
            num_scalar_prefetch=0,
            grid=grid,
            in_specs=in_specs,
            out_specs=[
                pl.BlockSpec((block_n, block_q, dp), lambda b, qi: (b, qi, 0)),
                pl.BlockSpec((block_n, block_q, sp), lambda b, qi: (b, qi, 0)),
            ],
            scratch_shapes=[
                pltpu.VMEM((block_n, sp, dp), compute_dtype),   # cached K proj
                pltpu.VMEM((block_n, sp, dp), compute_dtype),   # cached V proj
            ],
        ),
        compiler_params=pltpu.CompilerParams(
            # Batch blocks are independent ("parallel", shardable on v7x's two
            # TCs); query tiles reuse the cached K/V scratch ("arbitrary").
            dimension_semantics=("parallel", "arbitrary"),
            vmem_limit_bytes=_VMEM_LIMIT,
        ),
    )(*inputs)

    # Slice padding off (cheap XLA slice; kernel stores stay lane-dense).
    return out_p[:N, :Q, :D], attn_p[:N, :Q, :S]


def _reference(queries, keys, values, wq, wk, wv, attn_mask=None):
    Q = queries @ wq.T
    K = keys @ wk.T
    V = values @ wv.T
    scores = jnp.einsum("nqd,nsd->nqs", Q, K) / (queries.shape[-1] ** 0.5)
    if attn_mask is not None:
        scores = jnp.where(attn_mask, -jnp.inf, scores)
    attn = jax.nn.softmax(scores, axis=-1)
    out = jnp.einsum("nqs,nsd->nqd", attn, V)
    return out, attn


if __name__ == "__main__":
    key = jax.random.PRNGKey(0)
    N, num_queries, spatial, embed_dim = 2, 8, 16, 32

    k_q, k_k, k_v, k_wq, k_wk, k_wv, k_m = jax.random.split(key, 7)

    queries = jax.random.normal(k_q, (N, num_queries, embed_dim), jnp.float32)
    keys = jax.random.normal(k_k, (N, spatial, embed_dim), jnp.float32)
    values = jax.random.normal(k_v, (N, spatial, embed_dim), jnp.float32)

    # Deterministic nn.Linear-style weights (out_features, in_features), no bias.
    bound = 1.0 / (embed_dim ** 0.5)
    wq = jax.random.uniform(k_wq, (embed_dim, embed_dim), jnp.float32, -bound, bound)
    wk = jax.random.uniform(k_wk, (embed_dim, embed_dim), jnp.float32, -bound, bound)
    wv = jax.random.uniform(k_wv, (embed_dim, embed_dim), jnp.float32, -bound, bound)

    # Boolean attention mask (True == masked); force column 0 open so no row is
    # fully masked (the reference produces NaN there, the kernel is uniform).
    attn_mask = jax.random.bernoulli(k_m, 0.25, (N, num_queries, spatial))
    attn_mask = attn_mask.at[:, :, 0].set(False)

    ref_out, ref_attn = _reference(queries, keys, values, wq, wk, wv, attn_mask)

    # 1) Default path: bf16 MXU operands, f32 accumulation (dtype-aware tol).
    out, attn = cross_attention(queries, keys, values, wq, wk, wv, attn_mask)
    jax.block_until_ready((out, attn))
    assert out.shape == (N, num_queries, embed_dim)
    assert attn.shape == (N, num_queries, spatial)
    assert jnp.allclose(out, ref_out, atol=5e-2, rtol=5e-2)
    assert jnp.allclose(attn, ref_attn, atol=3e-2, rtol=3e-2)

    # 2) f32 operands: matches the module to tight tolerance.
    out32, attn32 = cross_attention(queries, keys, values, wq, wk, wv, attn_mask,
                                    compute_dtype=jnp.float32)
    jax.block_until_ready((out32, attn32))
    assert jnp.allclose(out32, ref_out, atol=1e-4, rtol=1e-4)
    assert jnp.allclose(attn32, ref_attn, atol=1e-5, rtol=1e-5)

    # 3) mask=None path: padded key columns masked in-kernel via iota compare.
    ref_out2, ref_attn2 = _reference(queries, keys, values, wq, wk, wv, None)
    out2, attn2 = cross_attention(queries, keys, values, wq, wk, wv, None,
                                  compute_dtype=jnp.float32)
    jax.block_until_ready((out2, attn2))
    assert jnp.allclose(out2, ref_out2, atol=1e-4, rtol=1e-4)
    assert jnp.allclose(attn2, ref_attn2, atol=1e-5, rtol=1e-5)

    print("KERNEL_OK")
</pallas_src>

<mosaic_0001>
module attributes {stable_mosaic.version = 11 : i64} {
  func.func @kernel(%arg0: i32, %arg1: i32, %arg2: memref<1x16x128xbf16, #tpu.memory_space<vmem>>, %arg3: memref<1x128x128xbf16, #tpu.memory_space<vmem>>, %arg4: memref<1x128x128xbf16, #tpu.memory_space<vmem>>, %arg5: memref<1x16x128xi8, #tpu.memory_space<vmem>>, %arg6: memref<128x128xbf16, #tpu.memory_space<vmem>>, %arg7: memref<128x128xbf16, #tpu.memory_space<vmem>>, %arg8: memref<128x128xbf16, #tpu.memory_space<vmem>>, %arg9: memref<1x16x128xf32, #tpu.memory_space<vmem>>, %arg10: memref<1x16x128xf32, #tpu.memory_space<vmem>>, %arg11: memref<1x128x128xbf16, #tpu.memory_space<vmem>>, %arg12: memref<1x128x128xbf16, #tpu.memory_space<vmem>>) attributes {dimension_semantics = [#tpu.dimension_semantics<parallel>, #tpu.dimension_semantics<arbitrary>], iteration_bounds = array<i64: 2, 1>, scalar_prefetch = 0 : i64, scratch_operands = 2 : i64, tpu.core_type = #tpu.core_type<tc>, window_params = [{transform_indices = @transform_0, window_bounds = array<i64: 1, 16, 128>}, {transform_indices = @transform_1, window_bounds = array<i64: 1, 128, 128>}, {transform_indices = @transform_2, window_bounds = array<i64: 1, 128, 128>}, {transform_indices = @transform_3, window_bounds = array<i64: 1, 16, 128>}, {pipeline_mode = #tpu.pipeline_mode<synchronous>, transform_indices = @transform_4, window_bounds = array<i64: 128, 128>}, {pipeline_mode = #tpu.pipeline_mode<synchronous>, transform_indices = @transform_5, window_bounds = array<i64: 128, 128>}, {pipeline_mode = #tpu.pipeline_mode<synchronous>, transform_indices = @transform_6, window_bounds = array<i64: 128, 128>}, {transform_indices = @transform_7, window_bounds = array<i64: 1, 16, 128>}, {transform_indices = @transform_8, window_bounds = array<i64: 1, 16, 128>}]} {
    %c0_i32 = arith.constant 0 : i32
    %0 = arith.cmpi eq, %arg1, %c0_i32 : i32
    %1 = arith.extui %0 : i1 to i32
    %c0_i32_0 = arith.constant 0 : i32
    %2 = arith.cmpi ne, %1, %c0_i32_0 : i32
    scf.if %2 {
      %c0_25 = arith.constant 0 : index
      %c0_26 = arith.constant 0 : index
      %c0_27 = arith.constant 0 : index
      %31 = vector.load %arg3[%c0_25, %c0_26, %c0_27] : memref<1x128x128xbf16, #tpu.memory_space<vmem>>, vector<1x128x128xbf16>
      %32 = vector.shape_cast %31 : vector<1x128x128xbf16> to vector<128x128xbf16>
      %c0_28 = arith.constant 0 : index
      %c0_29 = arith.constant 0 : index
      %c0_30 = arith.constant 0 : index
      %33 = vector.load %arg4[%c0_28, %c0_29, %c0_30] : memref<1x128x128xbf16, #tpu.memory_space<vmem>>, vector<1x128x128xbf16>
      %34 = vector.shape_cast %33 : vector<1x128x128xbf16> to vector<128x128xbf16>
      %c0_31 = arith.constant 0 : index
      %c0_32 = arith.constant 0 : index
      %35 = vector.load %arg7[%c0_31, %c0_32] : memref<128x128xbf16, #tpu.memory_space<vmem>>, vector<128x128xbf16>
      %cst_33 = arith.constant dense<0.000000e+00> : vector<128x128xf32>
      %36 = tpu.matmul %32, %35, %cst_33 {dimension_numbers = #tpu.dot_dimension_numbers<[1], [0], [0], [1], [0, 0, 1, 1], [], []>} : vector<128x128xbf16>, vector<128x128xbf16>, vector<128x128xf32> -> vector<128x128xf32>
      %c0_34 = arith.constant 0 : index
      %c0_35 = arith.constant 0 : index
      %37 = vector.load %arg8[%c0_34, %c0_35] : memref<128x128xbf16, #tpu.memory_space<vmem>>, vector<128x128xbf16>
      %cst_36 = arith.constant dense<0.000000e+00> : vector<128x128xf32>
      %38 = tpu.matmul %34, %37, %cst_36 {dimension_numbers = #tpu.dot_dimension_numbers<[1], [0], [0], [1], [0, 0, 1, 1], [], []>} : vector<128x128xbf16>, vector<128x128xbf16>, vector<128x128xf32> -> vector<128x128xf32>
      %39 = vector.shape_cast %36 : vector<128x128xf32> to vector<1x128x128xf32>
      %40 = arith.truncf %39 : vector<1x128x128xf32> to vector<1x128x128xbf16>
      %c0_37 = arith.constant 0 : index
      %c0_38 = arith.constant 0 : index
      %c0_39 = arith.constant 0 : index
      %41 = vector.load %arg11[%c0_37, %c0_38, %c0_39] : memref<1x128x128xbf16, #tpu.memory_space<vmem>>, vector<1x128x128xbf16>
      tpu.vector_store %arg11[%c0_37, %c0_38, %c0_39], %40 {strides = array<i32>} : memref<1x128x128xbf16, #tpu.memory_space<vmem>>, vector<1x128x128xbf16>,
      %42 = vector.shape_cast %38 : vector<128x128xf32> to vector<1x128x128xf32>
      %43 = arith.truncf %42 : vector<1x128x128xf32> to vector<1x128x128xbf16>
      %c0_40 = arith.constant 0 : index
      %c0_41 = arith.constant 0 : index
      %c0_42 = arith.constant 0 : index
      %44 = vector.load %arg12[%c0_40, %c0_41, %c0_42] : memref<1x128x128xbf16, #tpu.memory_space<vmem>>, vector<1x128x128xbf16>
      tpu.vector_store %arg12[%c0_40, %c0_41, %c0_42], %43 {strides = array<i32>} : memref<1x128x128xbf16, #tpu.memory_space<vmem>>, vector<1x128x128xbf16>,
    } else {
    }
    %c0 = arith.constant 0 : index
    %c0_1 = arith.constant 0 : index
    %c0_2 = arith.constant 0 : index
    %3 = vector.load %arg2[%c0, %c0_1, %c0_2] : memref<1x16x128xbf16, #tpu.memory_space<vmem>>, vector<1x16x128xbf16>
    %4 = vector.shape_cast %3 : vector<1x16x128xbf16> to vector<16x128xbf16>
    %c0_3 = arith.constant 0 : index
    %c0_4 = arith.constant 0 : index
    %5 = vector.load %arg6[%c0_3, %c0_4] : memref<128x128xbf16, #tpu.memory_space<vmem>>, vector<128x128xbf16>
    %cst = arith.constant dense<0.000000e+00> : vector<16x128xf32>
    %6 = tpu.matmul %4, %5, %cst {dimension_numbers = #tpu.dot_dimension_numbers<[1], [0], [0], [1], [0, 0, 1, 1], [], []>} : vector<16x128xbf16>, vector<128x128xbf16>, vector<16x128xf32> -> vector<16x128xf32>
    %7 = vector.shape_cast %6 : vector<16x128xf32> to vector<1x16x128xf32>
    %8 = arith.truncf %7 : vector<1x16x128xf32> to vector<1x16x128xbf16>
    %c0_5 = arith.constant 0 : index
    %c0_6 = arith.constant 0 : index
    %c0_7 = arith.constant 0 : index
    %9 = vector.load %arg11[%c0_5, %c0_6, %c0_7] : memref<1x128x128xbf16, #tpu.memory_space<vmem>>, vector<1x128x128xbf16>
    "tpu.trace_start"() <{level = 10 : i32, message = "bqd,bkd->bqk"}> : () -> ()
    %cst_8 = arith.constant dense<0.000000e+00> : vector<1x16x128xf32>
    %10 = tpu.matmul %8, %9, %cst_8 {dimension_numbers = #tpu.dot_dimension_numbers<[2], [2], [1], [1], [0, 0, 0, 1, 1, 1], [0], [0]>} : vector<1x16x128xbf16>, vector<1x128x128xbf16>, vector<1x16x128xf32> -> vector<1x16x128xf32>
    "tpu.trace_stop"() : () -> ()
    %c0_9 = arith.constant 0 : index
    %c0_10 = arith.constant 0 : index
    %c0_11 = arith.constant 0 : index
    %11 = vector.load %arg5[%c0_9, %c0_10, %c0_11] : memref<1x16x128xi8, #tpu.memory_space<vmem>>, vector<1x16x128xi8>
    %c0_i8 = arith.constant 0 : i8
    %12 = vector.broadcast %c0_i8 : i8 to vector<1x16x128xi8>
    %13 = arith.cmpi ne, %11, %12 : vector<1x16x128xi8>
    %cst_12 = arith.constant -1.000000e+30 : f32
    %14 = vector.broadcast %cst_12 : f32 to vector<1x16x128xf32>
    %15 = arith.select %13, %14, %10 : vector<1x16x128xi1>, vector<1x16x128xf32>
    %cst_13 = arith.constant dense<0xFF800000> : vector<1x16xf32>
    %16 = vector.multi_reduction <maximumf>, %15, %cst_13 [2] : vector<1x16x128xf32> to vector<1x16xf32>
    %17 = vector.shape_cast %16 : vector<1x16xf32> to vector<1x16x1xf32>
    %18 = vector.broadcast %17 : vector<1x16x1xf32> to vector<1x16x128xf32>
    %19 = arith.subf %15, %18 : vector<1x16x128xf32>
    %20 = math.exp %19 : vector<1x16x128xf32>
    %cst_14 = arith.constant dense<0.000000e+00> : vector<1x16xf32>
    %21 = vector.multi_reduction <add>, %20, %cst_14 [2] : vector<1x16x128xf32> to vector<1x16xf32>
    %22 = vector.shape_cast %21 : vector<1x16xf32> to vector<1x16x1xf32>
    %23 = tpu.reciprocal %22 : vector<1x16x1xf32> -> vector<1x16x1xf32>
    %24 = vector.broadcast %23 : vector<1x16x1xf32> to vector<1x16x128xf32>
    %25 = arith.mulf %20, %24 : vector<1x16x128xf32>
    %26 = arith.truncf %25 : vector<1x16x128xf32> to vector<1x16x128xbf16>
    %c0_15 = arith.constant 0 : index
    %c0_16 = arith.constant 0 : index
    %c0_17 = arith.constant 0 : index
    %27 = vector.load %arg12[%c0_15, %c0_16, %c0_17] : memref<1x128x128xbf16, #tpu.memory_space<vmem>>, vector<1x128x128xbf16>
    "tpu.trace_start"() <{level = 10 : i32, message = "bqs,bsd->bqd"}> : () -> ()
    %cst_18 = arith.constant dense<0.000000e+00> : vector<1x16x128xf32>
    %28 = tpu.matmul %26, %27, %cst_18 {dimension_numbers = #tpu.dot_dimension_numbers<[2], [1], [1], [2], [0, 0, 0, 1, 1, 2], [0], [0]>} : vector<1x16x128xbf16>, vector<1x128x128xbf16>, vector<1x16x128xf32> -> vector<1x16x128xf32>
    "tpu.trace_stop"() : () -> ()
    %c0_19 = arith.constant 0 : index
    %c0_20 = arith.constant 0 : index
    %c0_21 = arith.constant 0 : index
    %29 = vector.load %arg9[%c0_19, %c0_20, %c0_21] : memref<1x16x128xf32, #tpu.memory_space<vmem>>, vector<1x16x128xf32>
    tpu.vector_store %arg9[%c0_19, %c0_20, %c0_21], %28 {strides = array<i32>} : memref<1x16x128xf32, #tpu.memory_space<vmem>>, vector<1x16x128xf32>,
    %c0_22 = arith.constant 0 : index
    %c0_23 = arith.constant 0 : index
    %c0_24 = arith.constant 0 : index
    %30 = vector.load %arg10[%c0_22, %c0_23, %c0_24] : memref<1x16x128xf32, #tpu.memory_space<vmem>>, vector<1x16x128xf32>
    tpu.vector_store %arg10[%c0_22, %c0_23, %c0_24], %25 {strides = array<i32>} : memref<1x16x128xf32, #tpu.memory_space<vmem>>, vector<1x16x128xf32>,
    return
  }
  func.func @transform_0(%arg0: i32, %arg1: i32) -> (i32, i32, i32) {
    %c0_i32 = arith.constant 0 : i32
    %c0_i32_0 = arith.constant 0 : i32
    return %arg0, %arg1, %c0_i32 : i32, i32, i32
  }
  func.func @transform_1(%arg0: i32, %arg1: i32) -> (i32, i32, i32) {
    %c0_i32 = arith.constant 0 : i32
    %c0_i32_0 = arith.constant 0 : i32
    %c0_i32_1 = arith.constant 0 : i32
    return %arg0, %c0_i32, %c0_i32_0 : i32, i32, i32
  }
  func.func @transform_2(%arg0: i32, %arg1: i32) -> (i32, i32, i32) {
    %c0_i32 = arith.constant 0 : i32
    %c0_i32_0 = arith.constant 0 : i32
    %c0_i32_1 = arith.constant 0 : i32
    return %arg0, %c0_i32, %c0_i32_0 : i32, i32, i32
  }
  func.func @transform_3(%arg0: i32, %arg1: i32) -> (i32, i32, i32) {
    %c0_i32 = arith.constant 0 : i32
    %c0_i32_0 = arith.constant 0 : i32
    return %arg0, %arg1, %c0_i32 : i32, i32, i32
  }
  func.func @transform_4(%arg0: i32, %arg1: i32) -> (i32, i32) {
    %c0_i32 = arith.constant 0 : i32
    %c0_i32_0 = arith.constant 0 : i32
    %c0_i32_1 = arith.constant 0 : i32
    return %c0_i32, %c0_i32_0 : i32, i32
  }
  func.func @transform_5(%arg0: i32, %arg1: i32) -> (i32, i32) {
    %c0_i32 = arith.constant 0 : i32
    %c0_i32_0 = arith.constant 0 : i32
    %c0_i32_1 = arith.constant 0 : i32
    return %c0_i32, %c0_i32_0 : i32, i32
  }
  func.func @transform_6(%arg0: i32, %arg1: i32) -> (i32, i32) {
    %c0_i32 = arith.constant 0 : i32
    %c0_i32_0 = arith.constant 0 : i32
    %c0_i32_1 = arith.constant 0 : i32
    return %c0_i32, %c0_i32_0 : i32, i32
  }
  func.func @transform_7(%arg0: i32, %arg1: i32) -> (i32, i32, i32) {
    %c0_i32 = arith.constant 0 : i32
    %c0_i32_0 = arith.constant 0 : i32
    return %arg0, %arg1, %c0_i32 : i32, i32, i32
  }
  func.func @transform_8(%arg0: i32, %arg1: i32) -> (i32, i32, i32) {
    %c0_i32 = arith.constant 0 : i32
    %c0_i32_0 = arith.constant 0 : i32
    return %arg0, %arg1, %c0_i32 : i32, i32, i32
  }
}

</mosaic_0001>

<llo_original>
// kernel: tpu_custom_call.1
$region0: #{tpu_custom_call.1}
  #allocation0 [shape = 'u32[]', space=smem, size = 0x4, offset = 0x4, fixed_abs, tag = 'smem constant byte address 0x4 - core index']
  #allocation1 [shape = 'u32[144,128]{1,0:T(1,128)}', space=vmem, size = 0x12000, scoped, tag = 'internal scratch']
  #allocation2 [shape = 'bf16[1,128,128]{2,1,0:T(16,128)(2,1)}', space=vmem, size = 0x8000, scoped, tag = 'scratch operand']
  #allocation3 [shape = 'bf16[1,128,128]{2,1,0:T(16,128)(2,1)}', space=vmem, size = 0x8000, scoped, tag = 'scratch operand']
  %s0 = inlined_call_operand.hbm [shape: bf16[2,16,128], index: 0, kind: input, shape index: {}]
  %s1 = inlined_call_operand.hbm [shape: bf16[2,128,128], index: 1, kind: input, shape index: {}]
  %s2 = inlined_call_operand.hbm [shape: bf16[2,128,128], index: 2, kind: input, shape index: {}]
  %s3 = inlined_call_operand.hbm [shape: s8[2,16,128], index: 3, kind: input, shape index: {}]
  %s4 = inlined_call_operand.hbm [shape: bf16[128,128], index: 4, kind: input, shape index: {}]
  %s5 = inlined_call_operand.hbm [shape: bf16[128,128], index: 5, kind: input, shape index: {}]
  %s6 = inlined_call_operand.hbm [shape: bf16[128,128], index: 6, kind: input, shape index: {}]
  %s7 = inlined_call_operand.hbm [shape: f32[2,16,128], index: 7, kind: output, shape index: {0}]
  %s8 = inlined_call_operand.hbm [shape: f32[2,16,128], index: 8, kind: output, shape index: {1}]
  %9 = xla_tuple %s7, %s8
  %s10 = sld [smem:[#allocation0]]
  $region101: #{tpu_custom_call.1} parent=0
    _
  %s12 = ssub.s32 1, %s10
  %s13 = scalar_select 0, %s12, %s10
  $region1: #{tpu_custom_call.1} parent=0
    #allocation4 [shape = 'u8[8192]{0}', space=vmem, size = 0x2000, scoped, tag = 'input window, operand 0']
    #allocation5 [shape = 's32[2]{0}', space=sflag, size = 0x8, scoped, tag = 'scoped memory for tpu_custom_call.1']
    #allocation6 [shape = 's32[2]{0}', space=sflag, size = 0x8, scoped, tag = 'scoped memory for tpu_custom_call.1']
    #allocation7 [shape = 'u8[65536]{0}', space=vmem, size = 0x10000, scoped, tag = 'input window, operand 1']
    #allocation8 [shape = 's32[2]{0}', space=sflag, size = 0x8, scoped, tag = 'scoped memory for tpu_custom_call.1']
    #allocation9 [shape = 'u8[65536]{0}', space=vmem, size = 0x10000, scoped, tag = 'input window, operand 2']
    #allocation10 [shape = 'u8[4096]{0}', space=vmem, size = 0x1000, scoped, tag = 'input window, operand 3']
    #allocation11 [shape = 's32[2]{0}', space=sflag, size = 0x8, scoped, tag = 'scoped memory for tpu_custom_call.1']
    #allocation12 [shape = 'u8[32768]{0}', space=vmem, size = 0x8000, scoped, tag = 'input window, operand 4, single buffered']
    #allocation13 [shape = 'u8[32768]{0}', space=vmem, size = 0x8000, scoped, tag = 'input window, operand 5, single buffered']
    #allocation14 [shape = 's32[1]{0}', space=sflag, size = 0x4, scoped, tag = 'scoped memory for tpu_custom_call.1']
    #allocation15 [shape = 'u8[32768]{0}', space=vmem, size = 0x8000, scoped, tag = 'input window, operand 6, single buffered']
    #allocation16 [shape = 'u8[16384]{0}', space=vmem, size = 0x4000, scoped, tag = 'output window, operand 0']
    #allocation17 [shape = 'u8[16384]{0}', space=vmem, size = 0x4000, scoped, tag = 'output window, operand 1']
    #allocation18 [shape = 's32[2]{0}', space=sflag, size = 0x8, scoped, tag = 'scoped memory for tpu_custom_call.1']
    %14 = vsyncpa [#allocation5], 0
    %s15 = scalar_lea.sflag [#allocation5], 1
    %16 = vsyncpa %s15, 0
    %17 = vsyncpa [#allocation8], 0
    %s18 = scalar_lea.sflag [#allocation8], 1
    %19 = vsyncpa %s18, 0
    %20 = vsyncpa [#allocation11], 0
    %s21 = scalar_lea.sflag [#allocation11], 1
    %22 = vsyncpa %s21, 0
    %23 = vsyncpa [#allocation14], 0
    %24 = vsyncpa [#allocation6], 0
    %s25 = scalar_lea.sflag [#allocation6], 1
    %26 = vsyncpa %s25, 0
    %27 = vsyncpa [#allocation18], 0
    %s28 = scalar_lea.sflag [#allocation18], 1
    %29 = vsyncpa %s28, 0
    loop: start=0, step=1, limit=4
    $region2: #{tpu_custom_call.1} parent=1 // loop_pre_header
      _
    $region3: #{tpu_custom_call.1} parent=1 // loop_header
      %s31 = sphi 0, %s35
      %p32 = scmp.ge.s32.totalorder %s31, 4
      %s38 = sphi 0, %s50
      %s39 = sphi 0, %s46
      %s40 = sphi 0, %s38
      %s41 = sphi 0, %s39
      %s42 = sphi 0, %s40
      %s43 = sphi 0, %s41
      %s55 = sphi 0, %s57
      %s58 = sphi 0, %s55
      %s59 = sphi 0, %s58
      %s75 = sphi 0, %s59
      %s81 = sphi 0, %s83
      %s84 = sphi 0, %s81
      %s85 = sphi 0, %s84
      %s101 = sphi 0, %s85
      %s107 = sphi 0, %s109
      %s110 = sphi 0, %s107
      %s111 = sphi 0, %s110
      %s127 = sphi 0, %s111
      %s135 = sphi 0, %s137
      %s138 = sphi 0, %s135
      %s139 = sphi 0, %s138
      %s155 = sphi 0, %s139
      %s159 = sphi 0, %s159
      %s161 = sphi 0, %s159
      %s162 = sphi 0, %s161
      %s176 = sphi 0, %s162
      %s180 = sphi 0, %s180
      %s182 = sphi 0, %s180
      %s183 = sphi 0, %s182
      %s197 = sphi 0, %s183
      %s201 = sphi 0, %s201
      %s203 = sphi 0, %s201
      %s204 = sphi 0, %s203
      %s218 = sphi 0, %s204
      %s226 = sphi 0, %s228
      %s229 = sphi 0, %s226
      %s230 = sphi 0, %s229
      %s246 = sphi 0, %s230
      %s254 = sphi 0, %s256
      %s257 = sphi 0, %s254
      %s258 = sphi 0, %s257
      %s274 = sphi 0, %s258
    $region4: #{tpu_custom_call.1} parent=1 // loop_header_branch
      %34 = sbr.rel (%p32) target = $region8
    $region5: #{tpu_custom_call.1} parent=1 // loop_body
      %s36 = ssub.s32 %s31, 1
      %s37 = ssub.s32 %s31, 2
      %s44 = sadd.s32 1, %s39
      %p45 = scmp.ge.s32.totalorder %s44, 1
      %s46 = scalar_select %p45, 0, %s44
      %s47 = sadd.s32 1, %s38
      %s48 = scalar_select %p45, %s47, %s38
      %p49 = scmp.ge.s32.totalorder %s48, 2
      %s50 = scalar_select %p49, 0, %s48
      %s51 = ssub.s32 %s38, %s50
      %s52 = ssub.s32 %s39, %s46
      %s53 = sor.u32 %s51, %s52
      %p54 = scmp.eq.s32.totalorder %s53, 0
      %s56 = sadd.s32 %s55, 1
      %s57 = scalar_select %p54, %s55, %s56
      %p60 = pneg %p54
      %p61 = scmp.eq.s32.totalorder %s31, 1
      %p62 = por %p60, %p61
      %p63 = scmp.ne.s32.totalorder %s55, %s58
      %p64 = scmp.eq.s32.totalorder %s31, 0
      %p65 = por %p63, %p64
      %p66 = scmp.ne.s32.totalorder %s55, %s58
      %p67 = scmp.eq.s32.totalorder %s36, 1
      %p68 = por %p66, %p67
      %p69 = scmp.ne.s32.totalorder %s58, %s59
      %p70 = scmp.eq.s32.totalorder %s36, 0
      %p71 = por %p69, %p70
      %p72 = scmp.ne.s32.totalorder %s58, %s59
      %p73 = scmp.eq.s32.totalorder %s37, 1
      %p74 = por %p72, %p73
      %p76 = scmp.ne.s32.totalorder %s59, %s75
      %p77 = scmp.eq.s32.totalorder %s37, 0
      %p78 = por %p76, %p77
      %s79 = ssub.s32 %s38, %s50
      %p80 = scmp.eq.s32.totalorder %s79, 0
      %s82 = sadd.s32 %s81, 1
      %s83 = scalar_select %p80, %s81, %s82
      %p86 = pneg %p80
      %p87 = scmp.eq.s32.totalorder %s31, 1
      %p88 = por %p86, %p87
      %p89 = scmp.ne.s32.totalorder %s81, %s84
      %p90 = scmp.eq.s32.totalorder %s31, 0
      %p91 = por %p89, %p90
      %p92 = scmp.ne.s32.totalorder %s81, %s84
      %p93 = scmp.eq.s32.totalorder %s36, 1
      %p94 = por %p92, %p93
      %p95 = scmp.ne.s32.totalorder %s84, %s85
      %p96 = scmp.eq.s32.totalorder %s36, 0
      %p97 = por %p95, %p96
      %p98 = scmp.ne.s32.totalorder %s84, %s85
      %p99 = scmp.eq.s32.totalorder %s37, 1
      %p100 = por %p98, %p99
      %p102 = scmp.ne.s32.totalorder %s85, %s101
      %p103 = scmp.eq.s32.totalorder %s37, 0
      %p104 = por %p102, %p103
      %s105 = ssub.s32 %s38, %s50
      %p106 = scmp.eq.s32.totalorder %s105, 0
      %s108 = sadd.s32 %s107, 1
      %s109 = scalar_select %p106, %s107, %s108
      %p112 = pneg %p106
      %p113 = scmp.eq.s32.totalorder %s31, 1
      %p114 = por %p112, %p113
      %p115 = scmp.ne.s32.totalorder %s107, %s110
      %p116 = scmp.eq.s32.totalorder %s31, 0
      %p117 = por %p115, %p116
      %p118 = scmp.ne.s32.totalorder %s107, %s110
      %p119 = scmp.eq.s32.totalorder %s36, 1
      %p120 = por %p118, %p119
      %p121 = scmp.ne.s32.totalorder %s110, %s111
      %p122 = scmp.eq.s32.totalorder %s36, 0
      %p123 = por %p121, %p122
      %p124 = scmp.ne.s32.totalorder %s110, %s111
      %p125 = scmp.eq.s32.totalorder %s37, 1
      %p126 = por %p124, %p125
      %p128 = scmp.ne.s32.totalorder %s111, %s127
      %p129 = scmp.eq.s32.totalorder %s37, 0
      %p130 = por %p128, %p129
      %s131 = ssub.s32 %s38, %s50
      %s132 = ssub.s32 %s39, %s46
      %s133 = sor.u32 %s131, %s132
      %p134 = scmp.eq.s32.totalorder %s133, 0
      %s136 = sadd.s32 %s135, 1
      %s137 = scalar_select %p134, %s135, %s136
      %p140 = pneg %p134
      %p141 = scmp.eq.s32.totalorder %s31, 1
      %p142 = por %p140, %p141
      %p143 = scmp.ne.s32.totalorder %s135, %s138
      %p144 = scmp.eq.s32.totalorder %s31, 0
      %p145 = por %p143, %p144
      %p146 = scmp.ne.s32.totalorder %s135, %s138
      %p147 = scmp.eq.s32.totalorder %s36, 1
      %p148 = por %p146, %p147
      %p149 = scmp.ne.s32.totalorder %s138, %s139
      %p150 = scmp.eq.s32.totalorder %s36, 0
      %p151 = por %p149, %p150
      %p152 = scmp.ne.s32.totalorder %s138, %s139
      %p153 = scmp.eq.s32.totalorder %s37, 1
      %p154 = por %p152, %p153
      %p156 = scmp.ne.s32.totalorder %s139, %s155
      %p157 = scmp.eq.s32.totalorder %s37, 0
      %p158 = por %p156, %p157
      %s160 = sadd.s32 %s159, 1
      %p163 = scmp.eq.s32.totalorder %s31, 1
      %p164 = scmp.ne.s32.totalorder %s159, %s161
      %p165 = scmp.eq.s32.totalorder %s31, 0
      %p166 = por %p164, %p165
      %p167 = scmp.ne.s32.totalorder %s159, %s161
      %p168 = scmp.eq.s32.totalorder %s36, 1
      %p169 = por %p167, %p168
      %p170 = scmp.ne.s32.totalorder %s161, %s162
      %p171 = scmp.eq.s32.totalorder %s36, 0
      %p172 = por %p170, %p171
      %p173 = scmp.ne.s32.totalorder %s161, %s162
      %p174 = scmp.eq.s32.totalorder %s37, 1
      %p175 = por %p173, %p174
      %p177 = scmp.ne.s32.totalorder %s162, %s176
      %p178 = scmp.eq.s32.totalorder %s37, 0
      %p179 = por %p177, %p178
      %s181 = sadd.s32 %s180, 1
      %p184 = scmp.eq.s32.totalorder %s31, 1
      %p185 = scmp.ne.s32.totalorder %s180, %s182
      %p186 = scmp.eq.s32.totalorder %s31, 0
      %p187 = por %p185, %p186
      %p188 = scmp.ne.s32.totalorder %s180, %s182
      %p189 = scmp.eq.s32.totalorder %s36, 1
      %p190 = por %p188, %p189
      %p191 = scmp.ne.s32.totalorder %s182, %s183
      %p192 = scmp.eq.s32.totalorder %s36, 0
      %p193 = por %p191, %p192
      %p194 = scmp.ne.s32.totalorder %s182, %s183
      %p195 = scmp.eq.s32.totalorder %s37, 1
      %p196 = por %p194, %p195
      %p198 = scmp.ne.s32.totalorder %s183, %s197
      %p199 = scmp.eq.s32.totalorder %s37, 0
      %p200 = por %p198, %p199
      %s202 = sadd.s32 %s201, 1
      %p205 = scmp.eq.s32.totalorder %s31, 1
      %p206 = scmp.ne.s32.totalorder %s201, %s203
      %p207 = scmp.eq.s32.totalorder %s31, 0
      %p208 = por %p206, %p207
      %p209 = scmp.ne.s32.totalorder %s201, %s203
      %p210 = scmp.eq.s32.totalorder %s36, 1
      %p211 = por %p209, %p210
      %p212 = scmp.ne.s32.totalorder %s203, %s204
      %p213 = scmp.eq.s32.totalorder %s36, 0
      %p214 = por %p212, %p213
      %p215 = scmp.ne.s32.totalorder %s203, %s204
      %p216 = scmp.eq.s32.totalorder %s37, 1
      %p217 = por %p215, %p216
      %p219 = scmp.ne.s32.totalorder %s204, %s218
      %p220 = scmp.eq.s32.totalorder %s37, 0
      %p221 = por %p219, %p220
      %s222 = ssub.s32 %s38, %s50
      %s223 = ssub.s32 %s39, %s46
      %s224 = sor.u32 %s222, %s223
      %p225 = scmp.eq.s32.totalorder %s224, 0
      %s227 = sadd.s32 %s226, 1
      %s228 = scalar_select %p225, %s226, %s227
      %p231 = pneg %p225
      %p232 = scmp.eq.s32.totalorder %s31, 1
      %p233 = por %p231, %p232
      %p234 = scmp.ne.s32.totalorder %s226, %s229
      %p235 = scmp.eq.s32.totalorder %s31, 0
      %p236 = por %p234, %p235
      %p237 = scmp.ne.s32.totalorder %s226, %s229
      %p238 = scmp.eq.s32.totalorder %s36, 1
      %p239 = por %p237, %p238
      %p240 = scmp.ne.s32.totalorder %s229, %s230
      %p241 = scmp.eq.s32.totalorder %s36, 0
      %p242 = por %p240, %p241
      %p243 = scmp.ne.s32.totalorder %s229, %s230
      %p244 = scmp.eq.s32.totalorder %s37, 1
      %p245 = por %p243, %p244
      %p247 = scmp.ne.s32.totalorder %s230, %s246
      %p248 = scmp.eq.s32.totalorder %s37, 0
      %p249 = por %p247, %p248
      %s250 = ssub.s32 %s38, %s50
      %s251 = ssub.s32 %s39, %s46
      %s252 = sor.u32 %s250, %s251
      %p253 = scmp.eq.s32.totalorder %s252, 0
      %s255 = sadd.s32 %s254, 1
      %s256 = scalar_select %p253, %s254, %s255
      %p259 = pneg %p253
      %p260 = scmp.eq.s32.totalorder %s31, 1
      %p261 = por %p259, %p260
      %p262 = scmp.ne.s32.totalorder %s254, %s257
      %p263 = scmp.eq.s32.totalorder %s31, 0
      %p264 = por %p262, %p263
      %p265 = scmp.ne.s32.totalorder %s254, %s257
      %p266 = scmp.eq.s32.totalorder %s36, 1
      %p267 = por %p265, %p266
      %p268 = scmp.ne.s32.totalorder %s257, %s258
      %p269 = scmp.eq.s32.totalorder %s36, 0
      %p270 = por %p268, %p269
      %p271 = scmp.ne.s32.totalorder %s257, %s258
      %p272 = scmp.eq.s32.totalorder %s37, 1
      %p273 = por %p271, %p272
      %p275 = scmp.ne.s32.totalorder %s258, %s274
      %p276 = scmp.eq.s32.totalorder %s37, 0
      %p277 = por %p275, %p276
      %p278 = scmp.le.s32.totalorder 1, %s31
      %p279 = scmp.lt.s32.totalorder %s31, 3
      %p280 = pnand %p278, %p279
      %p281 = pneg %p280
      // Predicated region
      $region9: #{tpu_custom_call.1} parent=5 // pred_check
        _
      $region10: #{tpu_custom_call.1} parent=5 // pred_check_branch
        %283 = sbr.rel (%p280) target = $region12
      $region11: #{tpu_custom_call.1} parent=5 // pred_region
        %s284 = ssub.s32 %s31, 1
        // Predicated region
        $region13: #{tpu_custom_call.1} parent=11 // pred_check
          %p285 = pneg %p172
        $region14: #{tpu_custom_call.1} parent=11 // pred_check_branch
          %287 = sbr.rel (%p285) target = $region16
        $region15: #{tpu_custom_call.1} parent=11 // pred_region
          %s289 = ssub.s32 1024, 1024
          %290 = vsyncadd [#allocation11], %s289
          %s291 = sshll.u32 [#allocation12], 4
          %s292 = int_to_ptr.vmem [resolvable:$true] %s291
          %297 = dma.hbm_to_vmem [thread:$0]  %s4, 1024, %s292, [#allocation11], 64, 64, 4
        $region16: #{tpu_custom_call.1} parent=11 // pred_fallthru
          _
        // Predicated region
        $region17: #{tpu_custom_call.1} parent=11 // pred_check
          %p298 = pneg %p193
        $region18: #{tpu_custom_call.1} parent=11 // pred_check_branch
          %300 = sbr.rel (%p298) target = $region20
        $region19: #{tpu_custom_call.1} parent=11 // pred_region
          %s302 = ssub.s32 1024, 1024
          %303 = vsyncadd [#allocation14], %s302
          %s304 = sshll.u32 [#allocation13], 4
          %s305 = int_to_ptr.vmem [resolvable:$true] %s304
          %310 = dma.hbm_to_vmem [thread:$0]  %s5, 1024, %s305, [#allocation14], 64, 64, 4
        $region20: #{tpu_custom_call.1} parent=11 // pred_fallthru
          _
        // Predicated region
        $region21: #{tpu_custom_call.1} parent=11 // pred_check
          %p311 = pneg %p214
        $region22: #{tpu_custom_call.1} parent=11 // pred_check_branch
          %313 = sbr.rel (%p311) target = $region24
        $region23: #{tpu_custom_call.1} parent=11 // pred_region
          %s315 = ssub.s32 1024, 1024
          %316 = vsyncadd [#allocation14], %s315
          %s317 = sshll.u32 [#allocation15], 4
          %s318 = int_to_ptr.vmem [resolvable:$true] %s317
          %323 = dma.hbm_to_vmem [thread:$0]  %s6, 1024, %s318, [#allocation14], 64, 64, 4
        $region24: #{tpu_custom_call.1} parent=11 // pred_fallthru
          _
      $region12: #{tpu_custom_call.1} parent=5 // pred_fallthru
        _
      %p324 = scmp.lt.s32.totalorder %s31, 2
      // Predicated region
      $region25: #{tpu_custom_call.1} parent=5 // pred_check
        %p325 = pneg %p324
      $region26: #{tpu_custom_call.1} parent=5 // pred_check_branch
        %327 = sbr.rel (%p325) target = $region28
      $region27: #{tpu_custom_call.1} parent=5 // pred_region
        // Predicated region
        $region29: #{tpu_custom_call.1} parent=27 // pred_check
          %p328 = pneg %p65
        $region30: #{tpu_custom_call.1} parent=27 // pred_check_branch
          %330 = sbr.rel (%p328) target = $region32
        $region31: #{tpu_custom_call.1} parent=27 // pred_region
          %s331 = sand.u32 %s55, 1
          %s332 = scalar_lea.sflag [#allocation5], %s331
          %s333 = sand.u32 %s55, 1
          %s334 = smul.addr %s333, 8
          %s335 = scalar_lea.vmem [#allocation4], %s334
          %s336 = smul.u32 2, %s39
          %s338 = ssub.s32 128, 128
          %339 = vsyncadd %s332, %s338
          %s340 = smul.addr %s38, 2
          %s341 = sadd.s32 %s336, %s340
          %s342 = smul.addr %s341, 64
          %s343 = scalar_lea.hbm %s0, %s342
          %s344 = sshll.u32 %s335, 4
          %s345 = int_to_ptr.vmem [resolvable:$true] %s344
          %350 = dma.hbm_to_vmem [thread:$0]  %s343, 128, %s345, %s332, 64, 64, 4
        $region32: #{tpu_custom_call.1} parent=27 // pred_fallthru
          _
        // Predicated region
        $region33: #{tpu_custom_call.1} parent=27 // pred_check
          %p351 = pneg %p91
        $region34: #{tpu_custom_call.1} parent=27 // pred_check_branch
          %353 = sbr.rel (%p351) target = $region36
        $region35: #{tpu_custom_call.1} parent=27 // pred_region
          %s354 = sand.u32 %s31, 1
          %s355 = scalar_lea.sflag [#allocation8], %s354
          %s356 = sand.u32 %s81, 1
          %s357 = smul.addr %s356, 64
          %s358 = scalar_lea.vmem [#allocation7], %s357
          %s360 = ssub.s32 1024, 1024
          %361 = vsyncadd %s355, %s360
          %s362 = smul.addr %s38, 16
          %s363 = smul.addr %s362, 64
          %s364 = scalar_lea.hbm %s1, %s363
          %s365 = sshll.u32 %s358, 4
          %s366 = int_to_ptr.vmem [resolvable:$true] %s365
          %371 = dma.hbm_to_vmem [thread:$0]  %s364, 1024, %s366, %s355, 64, 64, 4
        $region36: #{tpu_custom_call.1} parent=27 // pred_fallthru
          _
        // Predicated region
        $region37: #{tpu_custom_call.1} parent=27 // pred_check
          %p372 = pneg %p117
        $region38: #{tpu_custom_call.1} parent=27 // pred_check_branch
          %374 = sbr.rel (%p372) target = $region40
        $region39: #{tpu_custom_call.1} parent=27 // pred_region
          %s375 = sand.u32 %s31, 1
          %s376 = scalar_lea.sflag [#allocation8], %s375
          %s377 = sand.u32 %s107, 1
          %s378 = smul.addr %s377, 64
          %s379 = scalar_lea.vmem [#allocation9], %s378
          %s381 = ssub.s32 1024, 1024
          %382 = vsyncadd %s376, %s381
          %s383 = smul.addr %s38, 16
          %s384 = smul.addr %s383, 64
          %s385 = scalar_lea.hbm %s2, %s384
          %s386 = sshll.u32 %s379, 4
          %s387 = int_to_ptr.vmem [resolvable:$true] %s386
          %392 = dma.hbm_to_vmem [thread:$0]  %s385, 1024, %s387, %s376, 64, 64, 4
        $region40: #{tpu_custom_call.1} parent=27 // pred_fallthru
          _
        // Predicated region
        $region41: #{tpu_custom_call.1} parent=27 // pred_check
          %p393 = pneg %p145
        $region42: #{tpu_custom_call.1} parent=27 // pred_check_branch
          %395 = sbr.rel (%p393) target = $region44
        $region43: #{tpu_custom_call.1} parent=27 // pred_region
          %s396 = sand.u32 %s31, 1
          %s397 = scalar_lea.sflag [#allocation11], %s396
          %s398 = sand.u32 %s135, 1
          %s399 = smul.addr %s398, 4
          %s400 = scalar_lea.vmem [#allocation10], %s399
          %s401 = smul.u32 2, %s39
          %s403 = ssub.s32 64, 64
          %404 = vsyncadd %s397, %s403
          %s405 = smul.addr %s38, 2
          %s406 = sadd.s32 %s401, %s405
          %s407 = smul.addr %s406, 32
          %s408 = scalar_lea.hbm %s3, %s407
          %s409 = sshll.u32 %s400, 4
          %s410 = int_to_ptr.vmem [resolvable:$true] %s409
          %415 = dma.hbm_to_vmem [thread:$0]  %s408, 64, %s410, %s397, 32, 32, 2
        $region44: #{tpu_custom_call.1} parent=27 // pred_fallthru
          _
      $region28: #{tpu_custom_call.1} parent=5 // pred_fallthru
        _
      %p416 = scmp.le.s32.totalorder 1, %s31
      %p417 = scmp.lt.s32.totalorder %s31, 3
      %p418 = pnand %p416, %p417
      %p419 = pneg %p418
      // Predicated region
      $region45: #{tpu_custom_call.1} parent=5 // pred_check
        _
      $region46: #{tpu_custom_call.1} parent=5 // pred_check_branch
        %421 = sbr.rel (%p418) target = $region48
      $region47: #{tpu_custom_call.1} parent=5 // pred_region
        %s422 = ssub.s32 %s31, 1
        %s423 = sand.u32 %s58, 1
        %s424 = scalar_lea.sflag [#allocation5], %s423
        %s425 = sand.u32 %s58, 1
        %s426 = smul.addr %s425, 8
        %s427 = scalar_lea.vmem [#allocation4], %s426
        // Predicated region
        $region49: #{tpu_custom_call.1} parent=47 // pred_check
          %p428 = pneg %p71
        $region50: #{tpu_custom_call.1} parent=47 // pred_check_branch
          %430 = sbr.rel (%p428) target = $region52
        $region51: #{tpu_custom_call.1} parent=47 // pred_region
          %431 = dma.done %s424, 128
        $region52: #{tpu_custom_call.1} parent=47 // pred_fallthru
          _
        %s432 = sand.u32 %s36, 1
        %s433 = scalar_lea.sflag [#allocation8], %s432
        %s434 = sand.u32 %s84, 1
        %s435 = smul.addr %s434, 64
        %s436 = scalar_lea.vmem [#allocation7], %s435
        // Predicated region
        $region53: #{tpu_custom_call.1} parent=47 // pred_check
          %p437 = pneg %p97
        $region54: #{tpu_custom_call.1} parent=47 // pred_check_branch
          %439 = sbr.rel (%p437) target = $region56
        $region55: #{tpu_custom_call.1} parent=47 // pred_region
          %440 = dma.done %s433, 1024
        $region56: #{tpu_custom_call.1} parent=47 // pred_fallthru
          _
        %s441 = sand.u32 %s36, 1
        %s442 = scalar_lea.sflag [#allocation8], %s441
        %s443 = sand.u32 %s110, 1
        %s444 = smul.addr %s443, 64
        %s445 = scalar_lea.vmem [#allocation9], %s444
        // Predicated region
        $region57: #{tpu_custom_call.1} parent=47 // pred_check
          %p446 = pneg %p123
        $region58: #{tpu_custom_call.1} parent=47 // pred_check_branch
          %448 = sbr.rel (%p446) target = $region60
        $region59: #{tpu_custom_call.1} parent=47 // pred_region
          %449 = dma.done %s442, 1024
        $region60: #{tpu_custom_call.1} parent=47 // pred_fallthru
          _
        %s450 = sand.u32 %s36, 1
        %s451 = scalar_lea.sflag [#allocation11], %s450
        %s452 = sand.u32 %s138, 1
        %s453 = smul.addr %s452, 4
        %s454 = scalar_lea.vmem [#allocation10], %s453
        // Predicated region
        $region61: #{tpu_custom_call.1} parent=47 // pred_check
          %p455 = pneg %p151
        $region62: #{tpu_custom_call.1} parent=47 // pred_check_branch
          %457 = sbr.rel (%p455) target = $region64
        $region63: #{tpu_custom_call.1} parent=47 // pred_region
          %458 = dma.done %s451, 64
        $region64: #{tpu_custom_call.1} parent=47 // pred_fallthru
          _
        // Predicated region
        $region65: #{tpu_custom_call.1} parent=47 // pred_check
          %p459 = pneg %p172
        $region66: #{tpu_custom_call.1} parent=47 // pred_check_branch
          %461 = sbr.rel (%p459) target = $region68
        $region67: #{tpu_custom_call.1} parent=47 // pred_region
          %462 = dma.done [#allocation11], 1024
        $region68: #{tpu_custom_call.1} parent=47 // pred_fallthru
          _
        // Predicated region
        $region69: #{tpu_custom_call.1} parent=47 // pred_check
          %p463 = pneg %p193
        $region70: #{tpu_custom_call.1} parent=47 // pred_check_branch
          %465 = sbr.rel (%p463) target = $region72
        $region71: #{tpu_custom_call.1} parent=47 // pred_region
          %466 = dma.done [#allocation14], 1024
        $region72: #{tpu_custom_call.1} parent=47 // pred_fallthru
          _
        // Predicated region
        $region73: #{tpu_custom_call.1} parent=47 // pred_check
          %p467 = pneg %p214
        $region74: #{tpu_custom_call.1} parent=47 // pred_check_branch
          %469 = sbr.rel (%p467) target = $region76
        $region75: #{tpu_custom_call.1} parent=47 // pred_region
          %470 = dma.done [#allocation14], 1024
        $region76: #{tpu_custom_call.1} parent=47 // pred_fallthru
          _
        %s471 = sand.u32 %s58, 1
        %s472 = scalar_lea.sflag [#allocation5], %s471
        %s473 = sand.u32 %s58, 1
        %s474 = smul.addr %s473, 8
        %s475 = scalar_lea.vmem [#allocation4], %s474
        %p476 = pneg %p71
        %p477 = pneg %p68
        %s478 = sand.u32 %s36, 1
        %s479 = scalar_lea.sflag [#allocation8], %s478
        %s480 = sand.u32 %s84, 1
        %s481 = smul.addr %s480, 64
        %s482 = scalar_lea.vmem [#allocation7], %s481
        %p483 = pneg %p97
        %p484 = pneg %p94
        %s485 = sand.u32 %s36, 1
        %s486 = scalar_lea.sflag [#allocation8], %s485
        %s487 = sand.u32 %s110, 1
        %s488 = smul.addr %s487, 64
        %s489 = scalar_lea.vmem [#allocation9], %s488
        %p490 = pneg %p123
        %p491 = pneg %p120
        %s492 = sand.u32 %s36, 1
        %s493 = scalar_lea.sflag [#allocation11], %s492
        %s494 = sand.u32 %s138, 1
        %s495 = smul.addr %s494, 4
        %s496 = scalar_lea.vmem [#allocation10], %s495
        %p497 = pneg %p151
        %p498 = pneg %p148
        %p499 = pneg %p172
        %p500 = pneg %p169
        %p501 = pneg %p193
        %p502 = pneg %p190
        %p503 = pneg %p214
        %p504 = pneg %p211
        %p505 = pneg %p242
        %p506 = pneg %p239
        %s507 = sand.u32 %s229, 1
        %s508 = scalar_lea.sflag [#allocation6], %s507
        %s509 = sand.u32 %s229, 1
        %s510 = smul.addr %s509, 16
        %s511 = scalar_lea.vmem [#allocation16], %s510
        %p512 = pneg %p270
        %p513 = pneg %p267
        %s514 = sand.u32 %s257, 1
        %s515 = scalar_lea.sflag [#allocation18], %s514
        %s516 = sand.u32 %s257, 1
        %s517 = smul.addr %s516, 16
        %s518 = scalar_lea.vmem [#allocation17], %s517
        %s519 = smul.u32 2, %s41
        %s520 = smul.u32 2, %s41
        %s521 = smul.u32 2, %s41
        %s522 = smul.u32 2, %s41
        %p526 = scmp.eq.s32.totalorder %s41, 0
        // Predicated region
        $region77: #{tpu_custom_call.1} parent=47 // pred_check
          %p527 = pneg %p526
        $region78: #{tpu_custom_call.1} parent=47 // pred_check_branch
          %529 = sbr.rel (%p527) target = $region80
        $region79: #{tpu_custom_call.1} parent=47 // pred_region
          %v530 = vld [vmem:[%s436] sm:$0xf]
          %v531 = vld [vmem:[%s436 + $0x4] sm:$0xf]
          %v532 = vld [vmem:[%s436 + $0x8] sm:$0xf]
          %v533 = vld [vmem:[%s436 + $0xc] sm:$0xf]
          %v534 = vld [vmem:[%s436 + $0x10] sm:$0xf]
          %v535 = vld [vmem:[%s436 + $0x14] sm:$0xf]
          %v536 = vld [vmem:[%s436 + $0x18] sm:$0xf]
          %v537 = vld [vmem:[%s436 + $0x1c] sm:$0xf]
          %v538 = vld [vmem:[%s436 + $0x20] sm:$0xf]
          %v539 = vld [vmem:[%s436 + $0x24] sm:$0xf]
          %v540 = vld [vmem:[%s436 + $0x28] sm:$0xf]
          %v541 = vld [vmem:[%s436 + $0x2c] sm:$0xf]
          %v542 = vld [vmem:[%s436 + $0x30] sm:$0xf]
          %v543 = vld [vmem:[%s436 + $0x34] sm:$0xf]
          %v544 = vld [vmem:[%s436 + $0x38] sm:$0xf]
          %v545 = vld [vmem:[%s436 + $0x3c] sm:$0xf]
          %v546 = vld [vmem:[%s445] sm:$0xf]
          %v547 = vld [vmem:[%s445 + $0x4] sm:$0xf]
          %v548 = vld [vmem:[%s445 + $0x8] sm:$0xf]
          %v549 = vld [vmem:[%s445 + $0xc] sm:$0xf]
          %v550 = vld [vmem:[%s445 + $0x10] sm:$0xf]
          %v551 = vld [vmem:[%s445 + $0x14] sm:$0xf]
          %v552 = vld [vmem:[%s445 + $0x18] sm:$0xf]
          %v553 = vld [vmem:[%s445 + $0x1c] sm:$0xf]
          %v554 = vld [vmem:[%s445 + $0x20] sm:$0xf]
          %v555 = vld [vmem:[%s445 + $0x24] sm:$0xf]
          %v556 = vld [vmem:[%s445 + $0x28] sm:$0xf]
          %v557 = vld [vmem:[%s445 + $0x2c] sm:$0xf]
          %v558 = vld [vmem:[%s445 + $0x30] sm:$0xf]
          %v559 = vld [vmem:[%s445 + $0x34] sm:$0xf]
          %v560 = vld [vmem:[%s445 + $0x38] sm:$0xf]
          %v561 = vld [vmem:[%s445 + $0x3c] sm:$0xf]
          %v562 = vld [vmem:[#allocation13] sm:$0xf]
          %v563 = vld [vmem:[#allocation13 + $0x4] sm:$0xf]
          %v564 = vld [vmem:[#allocation13 + $0x8] sm:$0xf]
          %v565 = vld [vmem:[#allocation13 + $0xc] sm:$0xf]
          %v566 = vld [vmem:[#allocation13 + $0x10] sm:$0xf]
          %v567 = vld [vmem:[#allocation13 + $0x14] sm:$0xf]
          %v568 = vld [vmem:[#allocation13 + $0x18] sm:$0xf]
          %v569 = vld [vmem:[#allocation13 + $0x1c] sm:$0xf]
          %v570 = vld [vmem:[#allocation13 + $0x20] sm:$0xf]
          %v571 = vld [vmem:[#allocation13 + $0x24] sm:$0xf]
          %v572 = vld [vmem:[#allocation13 + $0x28] sm:$0xf]
          %v573 = vld [vmem:[#allocation13 + $0x2c] sm:$0xf]
          %v574 = vld [vmem:[#allocation13 + $0x30] sm:$0xf]
          %v575 = vld [vmem:[#allocation13 + $0x34] sm:$0xf]
          %v576 = vld [vmem:[#allocation13 + $0x38] sm:$0xf]
          %v577 = vld [vmem:[#allocation13 + $0x3c] sm:$0xf]
          %v594 = vunpack.c.l.b16 %v530
          %v595 = vunpack.c.l.b16 %v531
          %v596 = vunpack.c.l.b16 %v532
          %v597 = vunpack.c.l.b16 %v533
          %v598 = vunpack.c.l.b16 %v534
          %v599 = vunpack.c.l.b16 %v535
          %v600 = vunpack.c.l.b16 %v536
          %v601 = vunpack.c.l.b16 %v537
          %v602 = vunpack.c.l.b16 %v538
          %v603 = vunpack.c.l.b16 %v539
          %v604 = vunpack.c.l.b16 %v540
          %v605 = vunpack.c.l.b16 %v541
          %v606 = vunpack.c.l.b16 %v542
          %v607 = vunpack.c.l.b16 %v543
          %v608 = vunpack.c.l.b16 %v544
          %v609 = vunpack.c.l.b16 %v545
          %v610 = vpack.c.b16 %v595, %v594
          %v611 = vpack.c.b16 %v597, %v596
          %v612 = vpack.c.b16 %v599, %v598
          %v613 = vpack.c.b16 %v601, %v600
          %v614 = vpack.c.b16 %v603, %v602
          %v615 = vpack.c.b16 %v605, %v604
          %v616 = vpack.c.b16 %v607, %v606
          %v617 = vpack.c.b16 %v609, %v608
          %v642 = vunpack.c.l.b16 %v562
          %v643 = vunpack.c.l.b16 %v563
          %v644 = vunpack.c.l.b16 %v564
          %v645 = vunpack.c.l.b16 %v565
          %v646 = vunpack.c.l.b16 %v566
          %v647 = vunpack.c.l.b16 %v567
          %v648 = vunpack.c.l.b16 %v568
          %v649 = vunpack.c.l.b16 %v569
          %v650 = vunpack.c.l.b16 %v570
          %v651 = vunpack.c.l.b16 %v571
          %v652 = vunpack.c.l.b16 %v572
          %v653 = vunpack.c.l.b16 %v573
          %v654 = vunpack.c.l.b16 %v574
          %v655 = vunpack.c.l.b16 %v575
          %v656 = vunpack.c.l.b16 %v576
          %v657 = vunpack.c.l.b16 %v577
          %v658 = vpack.c.b16 %v643, %v642
          %v659 = vpack.c.b16 %v645, %v644
          %v660 = vpack.c.b16 %v647, %v646
          %v661 = vpack.c.b16 %v649, %v648
          %v662 = vpack.c.b16 %v651, %v650
          %v663 = vpack.c.b16 %v653, %v652
          %v664 = vpack.c.b16 %v655, %v654
          %v665 = vpack.c.b16 %v657, %v656
          %674 = vmatprep.subr.bf16.mxu0 0
          %675 = vmatpush1.bf16.msra.mxu0 %v658
          %676 = vmatprep.subr.bf16.mxu0 0
          %677 = vmatpush1.bf16.msra.mxu0 %v659
          %678 = vmatprep.subr.bf16.mxu0 0
          %679 = vmatpush1.bf16.msra.mxu0 %v660
          %680 = vmatprep.subr.bf16.mxu0 0
          %681 = vmatpush1.bf16.msra.mxu0 %v661
          %682 = vmatprep.subr.bf16.mxu0 0
          %683 = vmatpush1.bf16.msra.mxu0 %v662
          %684 = vmatprep.subr.bf16.mxu0 0
          %685 = vmatpush1.bf16.msra.mxu0 %v663
          %686 = vmatprep.subr.bf16.mxu0 0
          %687 = vmatpush1.bf16.msra.mxu0 %v664
          %688 = vmatprep.subr.bf16.mxu0 0
          %689 = vmatpush1.bf16.msra.mxu0 %v665
          %690 = vmatprep.subr.bf16.mxu0 0
          %691 = vmatpush1.bf16.msra.mxu0 0
          %692 = vmatprep.subr.bf16.mxu0 0
          %693 = vmatpush1.bf16.msra.mxu0 0
          %694 = vmatprep.subr.bf16.mxu0 0
          %695 = vmatpush1.bf16.msra.mxu0 0
          %696 = vmatprep.subr.bf16.mxu0 0
          %697 = vmatpush1.bf16.msra.mxu0 0
          %698 = vmatprep.subr.bf16.mxu0 0
          %699 = vmatpush1.bf16.msra.mxu0 0
          %700 = vmatprep.subr.bf16.mxu0 0
          %701 = vmatpush1.bf16.msra.mxu0 0
          %702 = vmatprep.subr.bf16.mxu0 0
          %703 = vmatpush1.bf16.msra.mxu0 0
          %704 = vmatprep.subr.bf16.mxu0 0
          %705 = vmatpush1.bf16.msra.mxu0 0
          %706 = vmatprep.mubr.bf16.mxu0 0
          %707 = vmatmul.mubr.bf16.gmra.mrb[0].mxu0 %v610
          %v708 = vpop.f32.mrb[0].mxu0
          %v709 = vadd.f32 0.0, %v708
          %v710 = vpop.f32.mrb[0].mxu0
          %v711 = vpop.f32.mrb[0].mxu0
          %v712 = vadd.f32 0.0, %v711
          %v713 = vpop.f32.mrb[0].mxu0
          %714 = vmatprep.mubr.bf16.mxu0 0
          %715 = vmatmul.mubr.bf16.gmra.mrb[0].mxu0 %v611
          %v716 = vpop.f32.mrb[0].mxu0
          %v717 = vadd.f32 0.0, %v716
          %v718 = vpop.f32.mrb[0].mxu0
          %v719 = vpop.f32.mrb[0].mxu0
          %v720 = vadd.f32 0.0, %v719
          %v721 = vpop.f32.mrb[0].mxu0
          %722 = vmatprep.mubr.bf16.mxu0 0
          %723 = vmatmul.mubr.bf16.gmra.mrb[0].mxu0 %v612
          %v724 = vpop.f32.mrb[0].mxu0
          %v725 = vadd.f32 0.0, %v724
          %v726 = vpop.f32.mrb[0].mxu0
          %v727 = vpop.f32.mrb[0].mxu0
          %v728 = vadd.f32 0.0, %v727
          %v729 = vpop.f32.mrb[0].mxu0
          %730 = vmatprep.mubr.bf16.mxu0 0
          %731 = vmatmul.mubr.bf16.gmra.mrb[0].mxu0 %v613
          %v732 = vpop.f32.mrb[0].mxu0
          %v733 = vadd.f32 0.0, %v732
          %v734 = vpop.f32.mrb[0].mxu0
          %v735 = vpop.f32.mrb[0].mxu0
          %v736 = vadd.f32 0.0, %v735
          %v737 = vpop.f32.mrb[0].mxu0
          %738 = vmatprep.mubr.bf16.mxu0 0
          %739 = vmatmul.mubr.bf16.gmra.mrb[0].mxu0 %v614
          %v740 = vpop.f32.mrb[0].mxu0
          %v741 = vadd.f32 0.0, %v740
          %v742 = vpop.f32.mrb[0].mxu0
          %v743 = vpop.f32.mrb[0].mxu0
          %v744 = vadd.f32 0.0, %v743
          %v745 = vpop.f32.mrb[0].mxu0
          %746 = vmatprep.mubr.bf16.mxu0 0
          %747 = vmatmul.mubr.bf16.gmra.mrb[0].mxu0 %v615
          %v748 = vpop.f32.mrb[0].mxu0
          %v749 = vadd.f32 0.0, %v748
          %v750 = vpop.f32.mrb[0].mxu0
          %v751 = vpop.f32.mrb[0].mxu0
          %v752 = vadd.f32 0.0, %v751
          %v753 = vpop.f32.mrb[0].mxu0
          %754 = vmatprep.mubr.bf16.mxu0 0
          %755 = vmatmul.mubr.bf16.gmra.mrb[0].mxu0 %v616
          %v756 = vpop.f32.mrb[0].mxu0
          %v757 = vadd.f32 0.0, %v756
          %v758 = vpop.f32.mrb[0].mxu0
          %v759 = vpop.f32.mrb[0].mxu0
          %v760 = vadd.f32 0.0, %v759
          %v761 = vpop.f32.mrb[0].mxu0
          %762 = vmatprep.mubr.bf16.mxu0 0
          %763 = vmatmul.mubr.bf16.gmra.mrb[0].mxu0 %v617
          %v764 = vpop.f32.mrb[0].mxu0
          %v765 = vadd.f32 0.0, %v764
          %v766 = vpop.f32.mrb[0].mxu0
          %v767 = vpop.f32.mrb[0].mxu0
          %v768 = vadd.f32 0.0, %v767
          %v769 = vpop.f32.mrb[0].mxu0
          %770 = vdwg.mxu0
          %v771 = vld [vmem:[#allocation15] sm:$0xf]
          %v772 = vld [vmem:[#allocation15 + $0x4] sm:$0xf]
          %v773 = vld [vmem:[#allocation15 + $0x8] sm:$0xf]
          %v774 = vld [vmem:[#allocation15 + $0xc] sm:$0xf]
          %v775 = vld [vmem:[#allocation15 + $0x10] sm:$0xf]
          %v776 = vld [vmem:[#allocation15 + $0x14] sm:$0xf]
          %v777 = vld [vmem:[#allocation15 + $0x18] sm:$0xf]
          %v778 = vld [vmem:[#allocation15 + $0x1c] sm:$0xf]
          %v779 = vld [vmem:[#allocation15 + $0x20] sm:$0xf]
          %v780 = vld [vmem:[#allocation15 + $0x24] sm:$0xf]
          %v781 = vld [vmem:[#allocation15 + $0x28] sm:$0xf]
          %v782 = vld [vmem:[#allocation15 + $0x2c] sm:$0xf]
          %v783 = vld [vmem:[#allocation15 + $0x30] sm:$0xf]
          %v784 = vld [vmem:[#allocation15 + $0x34] sm:$0xf]
          %v785 = vld [vmem:[#allocation15 + $0x38] sm:$0xf]
          %v786 = vld [vmem:[#allocation15 + $0x3c] sm:$0xf]
          %v803 = vunpack.c.l.b16 %v546
          %v804 = vunpack.c.l.b16 %v547
          %v805 = vunpack.c.l.b16 %v548
          %v806 = vunpack.c.l.b16 %v549
          %v807 = vunpack.c.l.b16 %v550
          %v808 = vunpack.c.l.b16 %v551
          %v809 = vunpack.c.l.b16 %v552
          %v810 = vunpack.c.l.b16 %v553
          %v811 = vunpack.c.l.b16 %v554
          %v812 = vunpack.c.l.b16 %v555
          %v813 = vunpack.c.l.b16 %v556
          %v814 = vunpack.c.l.b16 %v557
          %v815 = vunpack.c.l.b16 %v558
          %v816 = vunpack.c.l.b16 %v559
          %v817 = vunpack.c.l.b16 %v560
          %v818 = vunpack.c.l.b16 %v561
          %v819 = vpack.c.b16 %v804, %v803
          %v820 = vpack.c.b16 %v806, %v805
          %v821 = vpack.c.b16 %v808, %v807
          %v822 = vpack.c.b16 %v810, %v809
          %v823 = vpack.c.b16 %v812, %v811
          %v824 = vpack.c.b16 %v814, %v813
          %v825 = vpack.c.b16 %v816, %v815
          %v826 = vpack.c.b16 %v818, %v817
          %v851 = vunpack.c.l.b16 %v771
          %v852 = vunpack.c.l.b16 %v772
          %v853 = vunpack.c.l.b16 %v773
          %v854 = vunpack.c.l.b16 %v774
          %v855 = vunpack.c.l.b16 %v775
          %v856 = vunpack.c.l.b16 %v776
          %v857 = vunpack.c.l.b16 %v777
          %v858 = vunpack.c.l.b16 %v778
          %v859 = vunpack.c.l.b16 %v779
          %v860 = vunpack.c.l.b16 %v780
          %v861 = vunpack.c.l.b16 %v781
          %v862 = vunpack.c.l.b16 %v782
          %v863 = vunpack.c.l.b16 %v783
          %v864 = vunpack.c.l.b16 %v784
          %v865 = vunpack.c.l.b16 %v785
          %v866 = vunpack.c.l.b16 %v786
          %v867 = vpack.c.b16 %v852, %v851
          %v868 = vpack.c.b16 %v854, %v853
          %v869 = vpack.c.b16 %v856, %v855
          %v870 = vpack.c.b16 %v858, %v857
          %v871 = vpack.c.b16 %v860, %v859
          %v872 = vpack.c.b16 %v862, %v861
          %v873 = vpack.c.b16 %v864, %v863
          %v874 = vpack.c.b16 %v866, %v865
          %883 = vmatprep.subr.bf16.mxu0 0
          %884 = vmatpush1.bf16.msra.mxu0 %v867
          %885 = vmatprep.subr.bf16.mxu0 0
          %886 = vmatpush1.bf16.msra.mxu0 %v868
          %887 = vmatprep.subr.bf16.mxu0 0
          %888 = vmatpush1.bf16.msra.mxu0 %v869
          %889 = vmatprep.subr.bf16.mxu0 0
          %890 = vmatpush1.bf16.msra.mxu0 %v870
          %891 = vmatprep.subr.bf16.mxu0 0
          %892 = vmatpush1.bf16.msra.mxu0 %v871
          %893 = vmatprep.subr.bf16.mxu0 0
          %894 = vmatpush1.bf16.msra.mxu0 %v872
          %895 = vmatprep.subr.bf16.mxu0 0
          %896 = vmatpush1.bf16.msra.mxu0 %v873
          %897 = vmatprep.subr.bf16.mxu0 0
          %898 = vmatpush1.bf16.msra.mxu0 %v874
          %899 = vmatprep.subr.bf16.mxu0 0
          %900 = vmatpush1.bf16.msra.mxu0 0
          %901 = vmatprep.subr.bf16.mxu0 0
          %902 = vmatpush1.bf16.msra.mxu0 0
          %903 = vmatprep.subr.bf16.mxu0 0
          %904 = vmatpush1.bf16.msra.mxu0 0
          %905 = vmatprep.subr.bf16.mxu0 0
          %906 = vmatpush1.bf16.msra.mxu0 0
          %907 = vmatprep.subr.bf16.mxu0 0
          %908 = vmatpush1.bf16.msra.mxu0 0
          %909 = vmatprep.subr.bf16.mxu0 0
          %910 = vmatpush1.bf16.msra.mxu0 0
          %911 = vmatprep.subr.bf16.mxu0 0
          %912 = vmatpush1.bf16.msra.mxu0 0
          %913 = vmatprep.subr.bf16.mxu0 0
          %914 = vmatpush1.bf16.msra.mxu0 0
          %915 = vmatprep.mubr.bf16.mxu0 0
          %916 = vmatmul.mubr.bf16.gmra.mrb[0].mxu0 %v819
          %v917 = vpop.f32.mrb[0].mxu0
          %v918 = vadd.f32 0.0, %v917
          %v919 = vpop.f32.mrb[0].mxu0
          %v920 = vpop.f32.mrb[0].mxu0
          %v921 = vadd.f32 0.0, %v920
          %v922 = vpop.f32.mrb[0].mxu0
          %923 = vmatprep.mubr.bf16.mxu0 0
          %924 = vmatmul.mubr.bf16.gmra.mrb[0].mxu0 %v820
          %v925 = vpop.f32.mrb[0].mxu0
          %v926 = vadd.f32 0.0, %v925
          %v927 = vpop.f32.mrb[0].mxu0
          %v928 = vpop.f32.mrb[0].mxu0
          %v929 = vadd.f32 0.0, %v928
          %v930 = vpop.f32.mrb[0].mxu0
          %931 = vmatprep.mubr.bf16.mxu0 0
          %932 = vmatmul.mubr.bf16.gmra.mrb[0].mxu0 %v821
          %v933 = vpop.f32.mrb[0].mxu0
          %v934 = vadd.f32 0.0, %v933
          %v935 = vpop.f32.mrb[0].mxu0
          %v936 = vpop.f32.mrb[0].mxu0
          %v937 = vadd.f32 0.0, %v936
          %v938 = vpop.f32.mrb[0].mxu0
          %939 = vmatprep.mubr.bf16.mxu0 0
          %940 = vmatmul.mubr.bf16.gmra.mrb[0].mxu0 %v822
          %v941 = vpop.f32.mrb[0].mxu0
          %v942 = vadd.f32 0.0, %v941
          %v943 = vpop.f32.mrb[0].mxu0
          %v944 = vpop.f32.mrb[0].mxu0
          %v945 = vadd.f32 0.0, %v944
          %v946 = vpop.f32.mrb[0].mxu0
          %947 = vmatprep.mubr.bf16.mxu0 0
          %948 = vmatmul.mubr.bf16.gmra.mrb[0].mxu0 %v823
          %v949 = vpop.f32.mrb[0].mxu0
          %v950 = vadd.f32 0.0, %v949
          %v951 = vpop.f32.mrb[0].mxu0
          %v952 = vpop.f32.mrb[0].mxu0
          %v953 = vadd.f32 0.0, %v952
          %v954 = vpop.f32.mrb[0].mxu0
          %955 = vmatprep.mubr.bf16.mxu0 0
          %956 = vmatmul.mubr.bf16.gmra.mrb[0].mxu0 %v824
          %v957 = vpop.f32.mrb[0].mxu0
          %v958 = vadd.f32 0.0, %v957
          %v959 = vpop.f32.mrb[0].mxu0
          %v960 = vpop.f32.mrb[0].mxu0
          %v961 = vadd.f32 0.0, %v960
          %v962 = vpop.f32.mrb[0].mxu0
          %963 = vmatprep.mubr.bf16.mxu0 0
          %964 = vmatmul.mubr.bf16.gmra.mrb[0].mxu0 %v825
          %v965 = vpop.f32.mrb[0].mxu0
          %v966 = vadd.f32 0.0, %v965
          %v967 = vpop.f32.mrb[0].mxu0
          %v968 = vpop.f32.mrb[0].mxu0
          %v969 = vadd.f32 0.0, %v968
          %v970 = vpop.f32.mrb[0].mxu0
          %971 = vmatprep.mubr.bf16.mxu0 0
          %972 = vmatmul.mubr.bf16.gmra.mrb[0].mxu0 %v826
          %v973 = vpop.f32.mrb[0].mxu0
          %v974 = vadd.f32 0.0, %v973
          %v975 = vpop.f32.mrb[0].mxu0
          %v976 = vpop.f32.mrb[0].mxu0
          %v977 = vadd.f32 0.0, %v976
          %v978 = vpop.f32.mrb[0].mxu0
          %979 = vdwg.mxu0
          %v980 = vpack.c.bf16 %v712, %v709
          %v981 = vpack.c.bf16 %v720, %v717
          %v982 = vpack.c.bf16 %v728, %v725
          %v983 = vpack.c.bf16 %v736, %v733
          %v984 = vpack.c.bf16 %v744, %v741
          %v985 = vpack.c.bf16 %v752, %v749
          %v986 = vpack.c.bf16 %v760, %v757
          %v987 = vpack.c.bf16 %v768, %v765
          %988 = vst [vmem:[#allocation2] sm:$0xff] %v980
          %989 = vst [vmem:[#allocation2 + $0x8] sm:$0xff] %v981
          %990 = vst [vmem:[#allocation2 + $0x10] sm:$0xff] %v982
          %991 = vst [vmem:[#allocation2 + $0x18] sm:$0xff] %v983
          %992 = vst [vmem:[#allocation2 + $0x20] sm:$0xff] %v984
          %993 = vst [vmem:[#allocation2 + $0x28] sm:$0xff] %v985
          %994 = vst [vmem:[#allocation2 + $0x30] sm:$0xff] %v986
          %995 = vst [vmem:[#allocation2 + $0x38] sm:$0xff] %v987
          %v996 = vpack.c.bf16 %v921, %v918
          %v997 = vpack.c.bf16 %v929, %v926
          %v998 = vpack.c.bf16 %v937, %v934
          %v999 = vpack.c.bf16 %v945, %v942
          %v1000 = vpack.c.bf16 %v953, %v950
          %v1001 = vpack.c.bf16 %v961, %v958
          %v1002 = vpack.c.bf16 %v969, %v966
          %v1003 = vpack.c.bf16 %v977, %v974
          %1004 = vst [vmem:[#allocation3] sm:$0xff] %v996
          %1005 = vst [vmem:[#allocation3 + $0x8] sm:$0xff] %v997
          %1006 = vst [vmem:[#allocation3 + $0x10] sm:$0xff] %v998
          %1007 = vst [vmem:[#allocation3 + $0x18] sm:$0xff] %v999
          %1008 = vst [vmem:[#allocation3 + $0x20] sm:$0xff] %v1000
          %1009 = vst [vmem:[#allocation3 + $0x28] sm:$0xff] %v1001
          %1010 = vst [vmem:[#allocation3 + $0x30] sm:$0xff] %v1002
          %1011 = vst [vmem:[#allocation3 + $0x38] sm:$0xff] %v1003
        $region80: #{tpu_custom_call.1} parent=47 // pred_fallthru
          _
        %v1012 = vld [vmem:[%s427] sm:$0xf]
        %v1013 = vld [vmem:[%s427 + $0x4] sm:$0xf]
        %v1014 = vld [vmem:[#allocation12] sm:$0xf]
        %v1015 = vld [vmem:[#allocation12 + $0x4] sm:$0xf]
        %v1016 = vld [vmem:[#allocation12 + $0x8] sm:$0xf]
        %v1017 = vld [vmem:[#allocation12 + $0xc] sm:$0xf]
        %v1018 = vld [vmem:[#allocation12 + $0x10] sm:$0xf]
        %v1019 = vld [vmem:[#allocation12 + $0x14] sm:$0xf]
        %v1020 = vld [vmem:[#allocation12 + $0x18] sm:$0xf]
        %v1021 = vld [vmem:[#allocation12 + $0x1c] sm:$0xf]
        %v1022 = vld [vmem:[#allocation12 + $0x20] sm:$0xf]
        %v1023 = vld [vmem:[#allocation12 + $0x24] sm:$0xf]
        %v1024 = vld [vmem:[#allocation12 + $0x28] sm:$0xf]
        %v1025 = vld [vmem:[#allocation12 + $0x2c] sm:$0xf]
        %v1026 = vld [vmem:[#allocation12 + $0x30] sm:$0xf]
        %v1027 = vld [vmem:[#allocation12 + $0x34] sm:$0xf]
        %v1028 = vld [vmem:[#allocation12 + $0x38] sm:$0xf]
        %v1029 = vld [vmem:[#allocation12 + $0x3c] sm:$0xf]
        %v1032 = vunpack.c.l.b16 %v1012
        %v1033 = vunpack.c.l.b16 %v1013
        %v1034 = vpack.c.b16 %v1033, %v1032
        %v1052 = vunpack.c.l.b16 %v1014
        %v1053 = vunpack.c.l.b16 %v1015
        %v1054 = vunpack.c.l.b16 %v1016
        %v1055 = vunpack.c.l.b16 %v1017
        %v1056 = vunpack.c.l.b16 %v1018
        %v1057 = vunpack.c.l.b16 %v1019
        %v1058 = vunpack.c.l.b16 %v1020
        %v1059 = vunpack.c.l.b16 %v1021
        %v1060 = vunpack.c.l.b16 %v1022
        %v1061 = vunpack.c.l.b16 %v1023
        %v1062 = vunpack.c.l.b16 %v1024
        %v1063 = vunpack.c.l.b16 %v1025
        %v1064 = vunpack.c.l.b16 %v1026
        %v1065 = vunpack.c.l.b16 %v1027
        %v1066 = vunpack.c.l.b16 %v1028
        %v1067 = vunpack.c.l.b16 %v1029
        %v1068 = vpack.c.b16 %v1053, %v1052
        %v1069 = vpack.c.b16 %v1055, %v1054
        %v1070 = vpack.c.b16 %v1057, %v1056
        %v1071 = vpack.c.b16 %v1059, %v1058
        %v1072 = vpack.c.b16 %v1061, %v1060
        %v1073 = vpack.c.b16 %v1063, %v1062
        %v1074 = vpack.c.b16 %v1065, %v1064
        %v1075 = vpack.c.b16 %v1067, %v1066
        %1084 = vmatprep.subr.bf16.mxu0 0
        %1085 = vmatpush1.bf16.msra.mxu0 %v1068
        %1086 = vmatprep.subr.bf16.mxu0 0
        %1087 = vmatpush1.bf16.msra.mxu0 %v1069
        %1088 = vmatprep.subr.bf16.mxu0 0
        %1089 = vmatpush1.bf16.msra.mxu0 %v1070
        %1090 = vmatprep.subr.bf16.mxu0 0
        %1091 = vmatpush1.bf16.msra.mxu0 %v1071
        %1092 = vmatprep.subr.bf16.mxu0 0
        %1093 = vmatpush1.bf16.msra.mxu0 %v1072
        %1094 = vmatprep.subr.bf16.mxu0 0
        %1095 = vmatpush1.bf16.msra.mxu0 %v1073
        %1096 = vmatprep.subr.bf16.mxu0 0
        %1097 = vmatpush1.bf16.msra.mxu0 %v1074
        %1098 = vmatprep.subr.bf16.mxu0 0
        %1099 = vmatpush1.bf16.msra.mxu0 %v1075
        %1100 = vmatprep.subr.bf16.mxu0 0
        %1101 = vmatpush1.bf16.msra.mxu0 0
        %1102 = vmatprep.subr.bf16.mxu0 0
        %1103 = vmatpush1.bf16.msra.mxu0 0
        %1104 = vmatprep.subr.bf16.mxu0 0
        %1105 = vmatpush1.bf16.msra.mxu0 0
        %1106 = vmatprep.subr.bf16.mxu0 0
        %1107 = vmatpush1.bf16.msra.mxu0 0
        %1108 = vmatprep.subr.bf16.mxu0 0
        %1109 = vmatpush1.bf16.msra.mxu0 0
        %1110 = vmatprep.subr.bf16.mxu0 0
        %1111 = vmatpush1.bf16.msra.mxu0 0
        %1112 = vmatprep.subr.bf16.mxu0 0
        %1113 = vmatpush1.bf16.msra.mxu0 0
        %1114 = vmatprep.subr.bf16.mxu0 0
        %1115 = vmatpush1.bf16.msra.mxu0 0
        %1116 = vmatprep.mubr.bf16.mxu0 0
        %1117 = vmatmul.mubr.bf16.gmra.mrb[0].mxu0 %v1034
        %v1118 = vpop.f32.mrb[0].mxu0
        %v1119 = vadd.f32 0.0, %v1118
        %v1120 = vpop.f32.mrb[0].mxu0
        %v1121 = vpop.f32.mrb[0].mxu0
        %v1122 = vadd.f32 0.0, %v1121
        %v1123 = vpop.f32.mrb[0].mxu0
        %1124 = vdwg.mxu0
        %v1125 = vpack.c.bf16 %v1122, %v1119
        %v1126 = vld [vmem:[#allocation2] sm:$0xff]
        %v1127 = vld [vmem:[#allocation2 + $0x8] sm:$0xff]
        %v1128 = vld [vmem:[#allocation2 + $0x10] sm:$0xff]
        %v1129 = vld [vmem:[#allocation2 + $0x18] sm:$0xff]
        %v1130 = vld [vmem:[#allocation2 + $0x20] sm:$0xff]
        %v1131 = vld [vmem:[#allocation2 + $0x28] sm:$0xff]
        %v1132 = vld [vmem:[#allocation2 + $0x30] sm:$0xff]
        %v1133 = vld [vmem:[#allocation2 + $0x38] sm:$0xff]
        %1134 = vmatprep.subr.bf16.mxu0 0
        %1135 = vmatpush1.bf16.xpose.msra.mxu0 %v1126
        %1136 = vmatprep.subr.bf16.mxu0 0
        %1137 = vmatpush1.bf16.xpose.msra.mxu0 %v1127
        %1138 = vmatprep.subr.bf16.mxu0 0
        %1139 = vmatpush1.bf16.xpose.msra.mxu0 %v1128
        %1140 = vmatprep.subr.bf16.mxu0 0
        %1141 = vmatpush1.bf16.xpose.msra.mxu0 %v1129
        %1142 = vmatprep.subr.bf16.mxu0 0
        %1143 = vmatpush1.bf16.xpose.msra.mxu0 %v1130
        %1144 = vmatprep.subr.bf16.mxu0 0
        %1145 = vmatpush1.bf16.xpose.msra.mxu0 %v1131
        %1146 = vmatprep.subr.bf16.mxu0 0
        %1147 = vmatpush1.bf16.xpose.msra.mxu0 %v1132
        %1148 = vmatprep.subr.bf16.mxu0 0
        %1149 = vmatpush1.bf16.xpose.msra.mxu0 %v1133
        %1150 = vmatprep.subr.bf16.mxu0 0
        %1151 = vmatpush1.bf16.xpose.msra.mxu0 0
        %1152 = vmatprep.subr.bf16.mxu0 0
        %1153 = vmatpush1.bf16.xpose.msra.mxu0 0
        %1154 = vmatprep.subr.bf16.mxu0 0
        %1155 = vmatpush1.bf16.xpose.msra.mxu0 0
        %1156 = vmatprep.subr.bf16.mxu0 0
        %1157 = vmatpush1.bf16.xpose.msra.mxu0 0
        %1158 = vmatprep.subr.bf16.mxu0 0
        %1159 = vmatpush1.bf16.xpose.msra.mxu0 0
        %1160 = vmatprep.subr.bf16.mxu0 0
        %1161 = vmatpush1.bf16.xpose.msra.mxu0 0
        %1162 = vmatprep.subr.bf16.mxu0 0
        %1163 = vmatpush1.bf16.xpose.msra.mxu0 0
        %1164 = vmatprep.subr.bf16.mxu0 0
        %1165 = vmatpush1.bf16.xpose.msra.mxu0 0
        %1166 = vmatprep.mubr.bf16.mxu0 0
        %1167 = vmatmul.mubr.bf16.gmra.mrb[0].mxu0 %v1125
        %v1168 = vpop.f32.mrb[0].mxu0
        %v1169 = vadd.f32 0.0, %v1168
        %v1170 = vpop.f32.mrb[0].mxu0
        %v1171 = vpop.f32.mrb[0].mxu0
        %v1172 = vadd.f32 0.0, %v1171
        %v1173 = vpop.f32.mrb[0].mxu0
        %1174 = vdwg.mxu0
        %v1175 = vld [vmem:[%s454] sm:$0x3]
        %v1176 = vld [vmem:[%s454 + $0x2] sm:$0x3]
        %vm1177 = vnez %v1175
        %vm1178 = vnez %v1176
        %v1179 = vsel %vm1177, 16843009, 0
        %v1180 = vsel %vm1178, 16843009, 0
        %v1181 = vunpack.c.0.s8 %v1179
        %v1182 = vunpack.c.0.s8 %v1180
        %vm1183 = vcmp.ne.s32.totalorder %v1181, 0
        %vm1184 = vcmp.ne.s32.totalorder %v1182, 0
        %v1185 = vsel %vm1183, -1e+30, %v1169
        %v1186 = vsel %vm1184, -1e+30, %v1172
        %1187 = vmax.xlane.f32.xlu0 %v1185
        %v1188 = vpop.xlane.xlu0 %1187
        %1189 = vmax.xlane.f32.xlu0 %v1186
        %v1190 = vpop.xlane.xlu0 %1189
        %v1191 = vsub.f32 %v1185, %v1188
        %v1192 = vsub.f32 %v1186, %v1190
        %v1193 = vmul.f32 %v1191, 1.442695
        %v1194 = vpow.pop %v1193
        %v1195 = vmul.f32 %v1192, 1.442695
        %v1196 = vpow.pop %v1195
        %1197 = vadd.xlane.f32.xlu0 %v1194
        %v1198 = vpop.xlane.xlu0 %1197
        %1199 = vadd.xlane.f32.xlu0 %v1196
        %v1200 = vpop.xlane.xlu0 %1199
        %v1201 = vrcp.pop %v1198
        %v1202 = vrcp.pop %v1200
        %v1203 = vmul.f32 %v1194, %v1201
        %v1204 = vmul.f32 %v1196, %v1202
        %v1205 = vpack.c.bf16 %v1204, %v1203
        %v1206 = vld [vmem:[#allocation3] sm:$0xff]
        %v1207 = vld [vmem:[#allocation3 + $0x8] sm:$0xff]
        %v1208 = vld [vmem:[#allocation3 + $0x10] sm:$0xff]
        %v1209 = vld [vmem:[#allocation3 + $0x18] sm:$0xff]
        %v1210 = vld [vmem:[#allocation3 + $0x20] sm:$0xff]
        %v1211 = vld [vmem:[#allocation3 + $0x28] sm:$0xff]
        %v1212 = vld [vmem:[#allocation3 + $0x30] sm:$0xff]
        %v1213 = vld [vmem:[#allocation3 + $0x38] sm:$0xff]
        %1214 = vmatprep.subr.bf16.mxu0 0
        %1215 = vmatpush1.bf16.msra.mxu0 %v1206
        %1216 = vmatprep.subr.bf16.mxu0 0
        %1217 = vmatpush1.bf16.msra.mxu0 %v1207
        %1218 = vmatprep.subr.bf16.mxu0 0
        %1219 = vmatpush1.bf16.msra.mxu0 %v1208
        %1220 = vmatprep.subr.bf16.mxu0 0
        %1221 = vmatpush1.bf16.msra.mxu0 %v1209
        %1222 = vmatprep.subr.bf16.mxu0 0
        %1223 = vmatpush1.bf16.msra.mxu0 %v1210
        %1224 = vmatprep.subr.bf16.mxu0 0
        %1225 = vmatpush1.bf16.msra.mxu0 %v1211
        %1226 = vmatprep.subr.bf16.mxu0 0
        %1227 = vmatpush1.bf16.msra.mxu0 %v1212
        %1228 = vmatprep.subr.bf16.mxu0 0
        %1229 = vmatpush1.bf16.msra.mxu0 %v1213
        %1230 = vmatprep.subr.bf16.mxu0 0
        %1231 = vmatpush1.bf16.msra.mxu0 0
        %1232 = vmatprep.subr.bf16.mxu0 0
        %1233 = vmatpush1.bf16.msra.mxu0 0
        %1234 = vmatprep.subr.bf16.mxu0 0
        %1235 = vmatpush1.bf16.msra.mxu0 0
        %1236 = vmatprep.subr.bf16.mxu0 0
        %1237 = vmatpush1.bf16.msra.mxu0 0
        %1238 = vmatprep.subr.bf16.mxu0 0
        %1239 = vmatpush1.bf16.msra.mxu0 0
        %1240 = vmatprep.subr.bf16.mxu0 0
        %1241 = vmatpush1.bf16.msra.mxu0 0
        %1242 = vmatprep.subr.bf16.mxu0 0
        %1243 = vmatpush1.bf16.msra.mxu0 0
        %1244 = vmatprep.subr.bf16.mxu0 0
        %1245 = vmatpush1.bf16.msra.mxu0 0
        %1246 = vmatprep.mubr.bf16.mxu0 0
        %1247 = vmatmul.mubr.bf16.gmra.mrb[0].mxu0 %v1205
        %v1248 = vpop.f32.mrb[0].mxu0
        %v1249 = vadd.f32 0.0, %v1248
        %v1250 = vpop.f32.mrb[0].mxu0
        %v1251 = vpop.f32.mrb[0].mxu0
        %v1252 = vadd.f32 0.0, %v1251
        %v1253 = vpop.f32.mrb[0].mxu0
        %1254 = vdwg.mxu0
        %1255 = vst [vmem:[%s511] sm:$0xff] %v1249
        %1256 = vst [vmem:[%s511 + $0x8] sm:$0xff] %v1252
        %1257 = vst [vmem:[%s518] sm:$0xff] %v1203
        %1258 = vst [vmem:[%s518 + $0x8] sm:$0xff] %v1204
        %s1259 = sand.u32 %s229, 1
        %s1260 = scalar_lea.sflag [#allocation6], %s1259
        %s1261 = sand.u32 %s229, 1
        %s1262 = smul.addr %s1261, 16
        %s1263 = scalar_lea.vmem [#allocation16], %s1262
        %s1264 = sand.u32 %s257, 1
        %s1265 = scalar_lea.sflag [#allocation18], %s1264
        %s1266 = sand.u32 %s257, 1
        %s1267 = smul.addr %s1266, 16
        %s1268 = scalar_lea.vmem [#allocation17], %s1267
        // Predicated region
        $region81: #{tpu_custom_call.1} parent=47 // pred_check
          %p1269 = pneg %p239
        $region82: #{tpu_custom_call.1} parent=47 // pred_check_branch
          %1271 = sbr.rel (%p1269) target = $region84
        $region83: #{tpu_custom_call.1} parent=47 // pred_region
          %s1272 = smul.u32 2, %s41
          %s1274 = ssub.s32 256, 256
          %1275 = vsyncadd %s1260, %s1274
          %s1276 = smul.addr %s40, 2
          %s1277 = sadd.s32 %s1272, %s1276
          %s1278 = smul.addr %s1277, 128
          %s1279 = scalar_lea.hbm %s7, %s1278
          %s1280 = sshll.u32 %s1263, 4
          %s1281 = int_to_ptr.vmem [resolvable:$true] %s1280
          %1286 = dma.vmem_to_hbm [thread:$0]  %s1281, 256, %s1279, %s1260, 128, 128, 8
        $region84: #{tpu_custom_call.1} parent=47 // pred_fallthru
          _
        // Predicated region
        $region85: #{tpu_custom_call.1} parent=47 // pred_check
          %p1287 = pneg %p267
        $region86: #{tpu_custom_call.1} parent=47 // pred_check_branch
          %1289 = sbr.rel (%p1287) target = $region88
        $region87: #{tpu_custom_call.1} parent=47 // pred_region
          %s1290 = smul.u32 2, %s41
          %s1292 = ssub.s32 256, 256
          %1293 = vsyncadd %s1265, %s1292
          %s1294 = smul.addr %s40, 2
          %s1295 = sadd.s32 %s1290, %s1294
          %s1296 = smul.addr %s1295, 128
          %s1297 = scalar_lea.hbm %s8, %s1296
          %s1298 = sshll.u32 %s1268, 4
          %s1299 = int_to_ptr.vmem [resolvable:$true] %s1298
          %1304 = dma.vmem_to_hbm [thread:$0]  %s1299, 256, %s1297, %s1265, 128, 128, 8
        $region88: #{tpu_custom_call.1} parent=47 // pred_fallthru
          _
      $region48: #{tpu_custom_call.1} parent=5 // pred_fallthru
        _
      %p1305 = scmp.le.s32.totalorder 2, %s31
      // Predicated region
      $region89: #{tpu_custom_call.1} parent=5 // pred_check
        %p1306 = pneg %p1305
      $region90: #{tpu_custom_call.1} parent=5 // pred_check_branch
        %1308 = sbr.rel (%p1306) target = $region92
      $region91: #{tpu_custom_call.1} parent=5 // pred_region
        %s1309 = ssub.s32 %s31, 2
        // Predicated region
        $region93: #{tpu_custom_call.1} parent=91 // pred_check
          %p1310 = pneg %p245
        $region94: #{tpu_custom_call.1} parent=91 // pred_check_branch
          %1312 = sbr.rel (%p1310) target = $region96
        $region95: #{tpu_custom_call.1} parent=91 // pred_region
          %s1313 = sand.u32 %s230, 1
          %s1314 = scalar_lea.sflag [#allocation6], %s1313
          %s1315 = sand.u32 %s230, 1
          %s1316 = smul.addr %s1315, 16
          %s1317 = scalar_lea.vmem [#allocation16], %s1316
          %1318 = dma.done %s1314, 256
        $region96: #{tpu_custom_call.1} parent=91 // pred_fallthru
          _
        // Predicated region
        $region97: #{tpu_custom_call.1} parent=91 // pred_check
          %p1319 = pneg %p273
        $region98: #{tpu_custom_call.1} parent=91 // pred_check_branch
          %1321 = sbr.rel (%p1319) target = $region100
        $region99: #{tpu_custom_call.1} parent=91 // pred_region
          %s1322 = sand.u32 %s258, 1
          %s1323 = scalar_lea.sflag [#allocation18], %s1322
          %s1324 = sand.u32 %s258, 1
          %s1325 = smul.addr %s1324, 16
          %s1326 = scalar_lea.vmem [#allocation17], %s1325
          %1327 = dma.done %s1323, 256
        $region100: #{tpu_custom_call.1} parent=91 // pred_fallthru
          _
      $region92: #{tpu_custom_call.1} parent=5 // pred_fallthru
        _
    $region6: #{tpu_custom_call.1} parent=1 // loop_footer
      %s35 = sadd.s32 1, %s31
    $region7: #{tpu_custom_call.1} parent=1 // loop_footer_branch
      %30 = sbr.rel target = $region3
    $region8: #{tpu_custom_call.1} parent=1 // loop_exit
      _
    %1328 = vsyncpa [#allocation5], 1
    %s1329 = scalar_lea.sflag [#allocation5], 1
    %1330 = vsyncpa %s1329, 1
    %1331 = vsyncpa [#allocation8], 1
    %s1332 = scalar_lea.sflag [#allocation8], 1
    %1333 = vsyncpa %s1332, 1
    %1334 = vsyncpa [#allocation11], 1
    %s1335 = scalar_lea.sflag [#allocation11], 1
    %1336 = vsyncpa %s1335, 1
    %1337 = vsyncpa [#allocation14], 1
    %1338 = vsyncpa [#allocation6], 1
    %s1339 = scalar_lea.sflag [#allocation6], 1
    %1340 = vsyncpa %s1339, 1
    %1341 = vsyncpa [#allocation18], 1
    %s1342 = scalar_lea.sflag [#allocation18], 1
    %1343 = vsyncpa %s1342, 1

</llo_original>
